<compile_context>
chip_gen: v6e
topology: v6e:2x2x1
jax: 0.10.0
libtpu: 0.0.40
codegen_flags: <defaults>
</compile_context>

<pallas_src>
from functools import partial

import jax
import jax.numpy as jnp
from jax.experimental import pallas as pl
from jax.experimental.pallas import tpu as pltpu

CONFIG = [(32, 3, 1), (128, 3, 1), (64, 3, 2), ['list', 1], (128, 3, 2),
          ['list', 2], (256, 3, 2), ['list', 8], (512, 3, 2), ['list', 8],
          (1024, 3, 2), ['list', 4], (512, 1, 1), (1024, 3, 1), 'sp',
          (256, 1, 1), 'up', (256, 1, 1), (512, 3, 1), 'sp', (128, 1, 1),
          'up', (128, 1, 1), (256, 3, 1), 'sp']

BN_EPS = 1e-5

# Tile-size limits; actual tiles are chosen per layer to exactly divide the
# (lightly) padded matmul dims.  Worst-case double-buffered VMEM use is ~5 MiB.
_TM_MAX = 512
_TM_CANDS = (512, 256, 128)
_TN_CANDS = (512, 256, 128)
_TK_CANDS = (512, 384, 256, 128)
_VMEM_LIMIT = 32 * 1024 * 1024


def _round_up(x, m):
    return ((x + m - 1) // m) * m


# ---------------------------------------------------------------------------
# Pallas kernel: one (tm, tn) output tile of  act( A @ W + bias )
#   A: (M, K) bf16 im2col patches, W: (K, N) bf16 weights with BN scale folded.
#   bias: (1, N) f32.  K is streamed over grid axis 2 into an f32 accumulator.
# ---------------------------------------------------------------------------
def _matmul_bias_act_kernel(a_ref, b_ref, c_ref, o_ref, acc_ref, *, leaky):
    @pl.when(pl.program_id(2) == 0)
    def _init():
        acc_ref[...] = jnp.zeros_like(acc_ref)

    acc_ref[...] += jnp.dot(a_ref[...], b_ref[...],
                            preferred_element_type=jnp.float32)

    @pl.when(pl.program_id(2) == pl.num_programs(2) - 1)
    def _finalize():
        y = acc_ref[...] + c_ref[...]            # (tm,tn) + (1,tn), f32
        if leaky:
            y = jnp.where(y >= 0, y, 0.1 * y)    # LeakyReLU(0.1)
        o_ref[...] = y.astype(o_ref.dtype)


def fused_matmul(a, b, bias, leaky, out_dtype):
    """a:(M,K) bf16 @ b:(Kp,Np) bf16 (pre-padded) + bias:(1,Np) f32."""
    M, K = a.shape
    Kp, Np = b.shape

    # Adaptive tiles: as large as possible while dividing the padded dims.
    if M <= _TM_MAX:
        Mp = _round_up(M, 16)
        tm = Mp
    else:
        Mp = _round_up(M, 128)
        tm = next(c for c in _TM_CANDS if Mp % c == 0)
    tn = next(c for c in _TN_CANDS if Np % c == 0)
    tk = next(c for c in _TK_CANDS if Kp % c == 0)

    if (Mp, Kp) != (M, K):
        a = jnp.pad(a, ((0, Mp - M), (0, Kp - K)))

    out = pl.pallas_call(
        partial(_matmul_bias_act_kernel, leaky=leaky),
        out_shape=jax.ShapeDtypeStruct((Mp, Np), out_dtype),
        grid_spec=pltpu.PrefetchScalarGridSpec(
            num_scalar_prefetch=0,
            grid=(Mp // tm, Np // tn, Kp // tk),
            in_specs=[
                pl.BlockSpec((tm, tk), lambda i, j, k: (i, k)),
                pl.BlockSpec((tk, tn), lambda i, j, k: (k, j)),
                pl.BlockSpec((1, tn), lambda i, j, k: (0, j)),
            ],
            out_specs=pl.BlockSpec((tm, tn), lambda i, j, k: (i, j)),
            scratch_shapes=[pltpu.VMEM((tm, tn), jnp.float32)],
        ),
        compiler_params=pltpu.CompilerParams(
            dimension_semantics=("parallel", "parallel", "arbitrary"),
            vmem_limit_bytes=_VMEM_LIMIT),
    )(a, b, bias)
    return out


# ---------------------------------------------------------------------------
# Conv2d (NHWC) via im2col (glue, fused by XLA under this jit) + Pallas matmul.
# ---------------------------------------------------------------------------
@partial(jax.jit,
         static_argnames=("ksize", "stride", "padding", "leaky", "cout",
                          "out_dtype"))
def conv2d_fused(x, w_kn, bias_1n, *, ksize, stride, padding, leaky, cout,
                 out_dtype):
    x = x.astype(jnp.bfloat16)
    B, H, W, Cin = x.shape
    if padding:
        x = jnp.pad(x, ((0, 0), (padding, padding), (padding, padding), (0, 0)))
    Hp, Wp = x.shape[1], x.shape[2]
    Ho = (Hp - ksize) // stride + 1
    Wo = (Wp - ksize) // stride + 1
    M = B * Ho * Wo

    if ksize == 1 and stride == 1:
        a = x.reshape(M, Cin)
    else:
        # TODO(synk): the ksize^2 im2col matrix is still materialized in HBM;
        # streaming the taps from the NHWC activation inside the kernel needs
        # element-offset (halo) blocks / manual DMA and is left for later.
        cols = []
        for kh in range(ksize):
            for kw in range(ksize):
                cols.append(x[:, kh:kh + stride * (Ho - 1) + 1:stride,
                              kw:kw + stride * (Wo - 1) + 1:stride, :])
        a = jnp.concatenate(cols, axis=-1).reshape(M, ksize * ksize * Cin)

    y = fused_matmul(a, w_kn, bias_1n, leaky, out_dtype)
    return y[:M, :cout].reshape(B, Ho, Wo, cout)


# ---------------------------------------------------------------------------
# Parameter init (deterministic) and module-equivalent forward functions.
# ---------------------------------------------------------------------------
class KeyGen:
    def __init__(self, key):
        self._key = key
        self._i = 0

    def __call__(self):
        self._i += 1
        return jax.random.fold_in(self._key, self._i)


def init_cnn(kg, cin, cout, ksize, stride, padding, bn_act=True):
    fan_in = ksize * ksize * cin
    w = jax.random.normal(kg(), (ksize, ksize, cin, cout), jnp.float32)
    w = w * (0.5 * jnp.sqrt(2.0 / fan_in))
    if bn_act:
        gamma = jax.random.uniform(kg(), (cout,), jnp.float32, 0.9, 1.1)
        beta = 0.01 * jax.random.normal(kg(), (cout,), jnp.float32)
        running_mean = jnp.zeros((cout,), jnp.float32)
        running_var = jnp.ones((cout,), jnp.float32)
        scale = gamma / jnp.sqrt(running_var + BN_EPS)
        bias = beta - running_mean * scale
        leaky = True
    else:
        scale = jnp.ones((cout,), jnp.float32)
        bias = 0.01 * jax.random.normal(kg(), (cout,), jnp.float32)  # conv bias
        leaky = False

    # Fold BN scale into the weight, reshape to (K, N) matmul layout, pre-pad
    # K/N to 128 multiples once at init, and store in bf16. Bias stays f32.
    # TODO(synk): the stem conv (K = 27) is still padded to K = 128.
    K, N = ksize * ksize * cin, cout
    Kp, Np = _round_up(K, 128), _round_up(N, 128)
    w_kn = (w * scale).reshape(K, N)
    w_kn = jnp.pad(w_kn, ((0, Kp - K), (0, Np - N))).astype(jnp.bfloat16)
    bias_1n = jnp.pad(bias.reshape(1, N), ((0, 0), (0, Np - N)))
    return {"w": w_kn, "b": bias_1n, "ksize": ksize, "stride": stride,
            "pad": padding, "leaky": leaky, "cout": cout}


def cnn_forward(p, x):
    out_dtype = jnp.bfloat16 if p["leaky"] else jnp.float32
    return conv2d_fused(x, p["w"], p["b"], ksize=p["ksize"],
                        stride=p["stride"], padding=p["pad"],
                        leaky=p["leaky"], cout=p["cout"], out_dtype=out_dtype)


def init_residual(kg, channels, use_residual, num_repeats):
    blocks = []
    for _ in range(num_repeats):
        c1 = init_cnn(kg, channels, channels // 2, 1, 1, 0, bn_act=True)
        c2 = init_cnn(kg, channels // 2, channels, 3, 1, 1, bn_act=True)
        blocks.append((c1, c2))
    return {"blocks": blocks, "use_residual": use_residual,
            "num_repeats": num_repeats}


def residual_forward(p, x):
    for c1, c2 in p["blocks"]:
        y = cnn_forward(c2, cnn_forward(c1, x))
        x = x + y if p["use_residual"] else y
    return x


def init_pred(kg, cin, num_classes):
    c1 = init_cnn(kg, cin, 2 * cin, 3, 1, 1, bn_act=True)
    c2 = init_cnn(kg, 2 * cin, (num_classes + 5) * 3, 1, 1, 0, bn_act=False)
    return {"c1": c1, "c2": c2, "num_classes": num_classes}


def pred_forward(p, x):
    nc = p["num_classes"]
    B, H, W, _ = x.shape
    y = cnn_forward(p["c2"], cnn_forward(p["c1"], x))   # (B, H, W, 3*(nc+5)) f32
    # Equivalent to torch reshape(B,3,nc+5,H,W).permute(0,1,3,4,2) on NCHW.
    return y.reshape(B, H, W, 3, nc + 5).transpose(0, 3, 1, 2, 4)


def init_yolov3(key, in_channels=3, num_classes=20):
    kg = KeyGen(key)
    layers = []
    cin = in_channels
    for module in CONFIG:
        if isinstance(module, tuple):
            cout, ksize, stride = module
            layers.append(("cnn", init_cnn(kg, cin, cout, ksize, stride,
                                           1 if ksize == 3 else 0, True)))
            cin = cout
        elif isinstance(module, list):
            num_repeats = module[1]
            layers.append(("res", init_residual(kg, cin, True, num_repeats)))
        elif module == "sp":
            layers.append(("res", init_residual(kg, cin, False, 1)))
            layers.append(("cnn", init_cnn(kg, cin, cin // 2, 1, 1, 0, True)))
            layers.append(("pred", init_pred(kg, cin // 2, num_classes)))
            cin = cin // 2
        elif module == "up":
            layers.append(("up", None))
            cin = cin * 3
    return layers


def upsample2_nearest(x):
    # nn.Upsample(scale_factor=2), mode='nearest', NHWC — single broadcast pass.
    B, H, W, C = x.shape
    x = jnp.broadcast_to(x[:, :, None, :, None, :], (B, H, 2, W, 2, C))
    return x.reshape(B, 2 * H, 2 * W, C)


def yolov3_forward(layers, x_nhwc):
    outputs = []
    route_connections = []
    x = x_nhwc.astype(jnp.bfloat16)      # intermediate activations kept in bf16
    for kind, p in layers:
        if kind == "pred":
            outputs.append(pred_forward(p, x))
            continue
        if kind == "cnn":
            x = cnn_forward(p, x)
        elif kind == "res":
            x = residual_forward(p, x)
            if p["num_repeats"] == 8:
                route_connections.append(x)
        elif kind == "up":
            x = upsample2_nearest(x)
            x = jnp.concatenate([x, route_connections[-1]], axis=-1)  # torch dim=1
            route_connections.pop()
    return outputs


# ---------------------------------------------------------------------------
if __name__ == "__main__":
    key = jax.random.PRNGKey(0)
    layers = init_yolov3(key, in_channels=3, num_classes=20)

    # PyTorch-style NCHW input (small: batch=2, 3x32x32), transposed to NHWC.
    x_nchw = jax.random.normal(jax.random.fold_in(key, 999),
                               (2, 3, 32, 32), jnp.float32)
    x_nhwc = jnp.transpose(x_nchw, (0, 2, 3, 1))

    outs = yolov3_forward(layers, x_nhwc)
    outs = jax.block_until_ready(outs)

    expected_shapes = [(2, 3, 1, 1, 25), (2, 3, 2, 2, 25), (2, 3, 4, 4, 25)]
    for o, e in zip(outs, expected_shapes):
        assert tuple(o.shape) == e, (tuple(o.shape), e)
        assert o.dtype == jnp.float32
        assert bool(jnp.all(jnp.isfinite(o)))

    print("KERNEL_OK")
</pallas_src>

<mosaic_0001>
module attributes {stable_mosaic.version = 11 : i64} {
  func.func @_matmul_bias_act_kernel(%arg0: i32, %arg1: i32, %arg2: i32, %arg3: memref<512x128xbf16, #tpu.memory_space<vmem>>, %arg4: memref<128x128xbf16, #tpu.memory_space<vmem>>, %arg5: memref<1x128xf32, #tpu.memory_space<vmem>>, %arg6: memref<512x128xbf16, #tpu.memory_space<vmem>>, %arg7: memref<512x128xf32, #tpu.memory_space<vmem>>) attributes {dimension_semantics = [#tpu.dimension_semantics<parallel>, #tpu.dimension_semantics<parallel>, #tpu.dimension_semantics<arbitrary>], iteration_bounds = array<i64: 4, 1, 1>, scalar_prefetch = 0 : i64, scratch_operands = 1 : i64, tpu.core_type = #tpu.core_type<tc>, window_params = [{transform_indices = @transform_0, window_bounds = array<i64: 512, 128>}, {transform_indices = @transform_1, window_bounds = array<i64: 128, 128>}, {transform_indices = @transform_2, window_bounds = array<i64: 1, 128>}, {transform_indices = @transform_3, window_bounds = array<i64: 512, 128>}]} {
    %c0_i32 = arith.constant 0 : i32
    %0 = arith.cmpi eq, %arg2, %c0_i32 : i32
    %1 = arith.extui %0 : i1 to i32
    %c0_i32_0 = arith.constant 0 : i32
    %2 = arith.cmpi ne, %1, %c0_i32_0 : i32
    scf.if %2 {
      %cst_10 = arith.constant 0.000000e+00 : f32
      %12 = vector.broadcast %cst_10 : f32 to vector<512x128xf32>
      %c0_11 = arith.constant 0 : index
      %c0_12 = arith.constant 0 : index
      %13 = vector.load %arg7[%c0_11, %c0_12] : memref<512x128xf32, #tpu.memory_space<vmem>>, vector<512x128xf32>
      tpu.vector_store %arg7[%c0_11, %c0_12], %12 {strides = array<i32>} : memref<512x128xf32, #tpu.memory_space<vmem>>, vector<512x128xf32>,
    } else {
    }
    %c0 = arith.constant 0 : index
    %c0_1 = arith.constant 0 : index
    %3 = vector.load %arg7[%c0, %c0_1] : memref<512x128xf32, #tpu.memory_space<vmem>>, vector<512x128xf32>
    %c0_2 = arith.constant 0 : index
    %c0_3 = arith.constant 0 : index
    %4 = vector.load %arg3[%c0_2, %c0_3] : memref<512x128xbf16, #tpu.memory_space<vmem>>, vector<512x128xbf16>
    %c0_4 = arith.constant 0 : index
    %c0_5 = arith.constant 0 : index
    %5 = vector.load %arg4[%c0_4, %c0_5] : memref<128x128xbf16, #tpu.memory_space<vmem>>, vector<128x128xbf16>
    %cst = arith.constant dense<0.000000e+00> : vector<512x128xf32>
    %6 = tpu.matmul %4, %5, %cst {dimension_numbers = #tpu.dot_dimension_numbers<[1], [0], [0], [1], [0, 0, 1, 1], [], []>} : vector<512x128xbf16>, vector<128x128xbf16>, vector<512x128xf32> -> vector<512x128xf32>
    %7 = arith.addf %3, %6 : vector<512x128xf32>
    %c0_6 = arith.constant 0 : index
    %c0_7 = arith.constant 0 : index
    %8 = vector.load %arg7[%c0_6, %c0_7] : memref<512x128xf32, #tpu.memory_space<vmem>>, vector<512x128xf32>
    tpu.vector_store %arg7[%c0_6, %c0_7], %7 {strides = array<i32>} : memref<512x128xf32, #tpu.memory_space<vmem>>, vector<512x128xf32>,
    %c0_i32_8 = arith.constant 0 : i32
    %9 = arith.cmpi eq, %arg2, %c0_i32_8 : i32
    %10 = arith.extui %9 : i1 to i32
    %c0_i32_9 = arith.constant 0 : i32
    %11 = arith.cmpi ne, %10, %c0_i32_9 : i32
    scf.if %11 {
      %c0_10 = arith.constant 0 : index
      %c0_11 = arith.constant 0 : index
      %12 = vector.load %arg7[%c0_10, %c0_11] : memref<512x128xf32, #tpu.memory_space<vmem>>, vector<512x128xf32>
      %c0_12 = arith.constant 0 : index
      %c0_13 = arith.constant 0 : index
      %13 = vector.load %arg5[%c0_12, %c0_13] : memref<1x128xf32, #tpu.memory_space<vmem>>, vector<1x128xf32>
      %14 = vector.broadcast %13 : vector<1x128xf32> to vector<512x128xf32>
      %15 = arith.addf %12, %14 : vector<512x128xf32>
      %cst_14 = arith.constant 0.000000e+00 : f32
      %16 = vector.broadcast %cst_14 : f32 to vector<512x128xf32>
      %17 = arith.cmpf oge, %15, %16 : vector<512x128xf32>
      %cst_15 = arith.constant 1.000000e-01 : f32
      %18 = vector.broadcast %cst_15 : f32 to vector<512x128xf32>
      %19 = arith.mulf %18, %15 : vector<512x128xf32>
      %20 = arith.select %17, %15, %19 : vector<512x128xi1>, vector<512x128xf32>
      %21 = arith.truncf %20 : vector<512x128xf32> to vector<512x128xbf16>
      %c0_16 = arith.constant 0 : index
      %c0_17 = arith.constant 0 : index
      %22 = vector.load %arg6[%c0_16, %c0_17] : memref<512x128xbf16, #tpu.memory_space<vmem>>, vector<512x128xbf16>
      tpu.vector_store %arg6[%c0_16, %c0_17], %21 {strides = array<i32>} : memref<512x128xbf16, #tpu.memory_space<vmem>>, vector<512x128xbf16>,
    } else {
    }
    return
  }
  func.func @transform_0(%arg0: i32, %arg1: i32, %arg2: i32) -> (i32, i32) {
    %c0_i32 = arith.constant 0 : i32
    return %arg0, %arg2 : i32, i32
  }
  func.func @transform_1(%arg0: i32, %arg1: i32, %arg2: i32) -> (i32, i32) {
    %c0_i32 = arith.constant 0 : i32
    return %arg2, %arg1 : i32, i32
  }
  func.func @transform_2(%arg0: i32, %arg1: i32, %arg2: i32) -> (i32, i32) {
    %c0_i32 = arith.constant 0 : i32
    %c0_i32_0 = arith.constant 0 : i32
    return %c0_i32, %arg1 : i32, i32
  }
  func.func @transform_3(%arg0: i32, %arg1: i32, %arg2: i32) -> (i32, i32) {
    %c0_i32 = arith.constant 0 : i32
    return %arg0, %arg1 : i32, i32
  }
}

</mosaic_0001>

<llo_original>
// kernel: conv2d_fused.1
$region0: #{conv2d_fused.1}
  #allocation0 [shape = 'u32[]', space=smem, size = 0x4, offset = 0x4, fixed_abs, tag = 'smem constant byte address 0x4 - core index']
  #allocation1 [shape = 'u32[144,128]{1,0:T(1,128)}', space=vmem, size = 0x12000, scoped, tag = 'internal scratch']
  #allocation2 [shape = 'f32[512,128]{1,0:T(8,128)}', space=vmem, size = 0x40000, scoped, tag = 'scratch operand']
  %s0 = inlined_call_operand.vmem [shape: bf16[2048,128], index: 0, kind: input, shape index: {}]
  %s1 = inlined_call_operand.vmem [shape: bf16[128,128], index: 1, kind: input, shape index: {}]
  %s2 = inlined_call_operand.vmem [shape: f32[1,128], index: 2, kind: input, shape index: {}]
  %s3 = inlined_call_operand.hbm [shape: bf16[2048,128], index: 3, kind: output, shape index: {}]
  %s4 = sld [smem:[#allocation0]]
  $region53: #{conv2d_fused.1} parent=0
    _
  %s6 = ssub.s32 1, %s4
  %s7 = scalar_select 0, %s6, %s4
  $region1: #{conv2d_fused.1} parent=0
    #allocation3 [shape = 'u8[262144]{0}', space=vmem, size = 0x40000, scoped, tag = 'output window, operand 0']
    #allocation4 [shape = 's32[2]{0}', space=sflag, size = 0x8, scoped, tag = 'scoped memory for conv2d_fused.1']
    %8 = vsyncpa [#allocation4], 0
    %s9 = scalar_lea.sflag [#allocation4], 1
    %10 = vsyncpa %s9, 0
    loop: start=0, step=1, limit=6
    $region2: #{conv2d_fused.1} parent=1 // loop_pre_header
      _
    $region3: #{conv2d_fused.1} parent=1 // loop_header
      %s12 = sphi 0, %s16
      %p13 = scmp.ge.s32.totalorder %s12, 6
      %s19 = sphi 0, %s38
      %s20 = sphi 0, %s34
      %s21 = sphi 0, %s30
      %s22 = sphi 0, %s19
      %s23 = sphi 0, %s20
      %s24 = sphi 0, %s21
      %s25 = sphi 0, %s22
      %s26 = sphi 0, %s23
      %s27 = sphi 0, %s24
      %s43 = sphi 0, %s45
      %s46 = sphi 0, %s43
      %s47 = sphi 0, %s46
      %s63 = sphi 0, %s47
      %s71 = sphi 0, %s73
      %s74 = sphi 0, %s71
      %s75 = sphi 0, %s74
      %s91 = sphi 0, %s75
      %s97 = sphi 0, %s99
      %s100 = sphi 0, %s97
      %s101 = sphi 0, %s100
      %s117 = sphi 0, %s101
      %s125 = sphi 0, %s127
      %s128 = sphi 0, %s125
      %s129 = sphi 0, %s128
      %s145 = sphi 0, %s129
    $region4: #{conv2d_fused.1} parent=1 // loop_header_branch
      %15 = sbr.rel (%p13) target = $region8
    $region5: #{conv2d_fused.1} parent=1 // loop_body
      %s17 = ssub.s32 %s12, 1
      %s18 = ssub.s32 %s12, 2
      %s28 = sadd.s32 1, %s21
      %p29 = scmp.ge.s32.totalorder %s28, 1
      %s30 = scalar_select %p29, 0, %s28
      %s31 = sadd.s32 1, %s20
      %s32 = scalar_select %p29, %s31, %s20
      %p33 = scmp.ge.s32.totalorder %s32, 1
      %s34 = scalar_select %p33, 0, %s32
      %s35 = sadd.s32 1, %s19
      %s36 = scalar_select %p33, %s35, %s19
      %p37 = scmp.ge.s32.totalorder %s36, 4
      %s38 = scalar_select %p37, 0, %s36
      %s39 = ssub.s32 %s19, %s38
      %s40 = ssub.s32 %s21, %s30
      %s41 = sor.u32 %s39, %s40
      %p42 = scmp.eq.s32.totalorder %s41, 0
      %s44 = sadd.s32 %s43, 1
      %s45 = scalar_select %p42, %s43, %s44
      %p48 = pneg %p42
      %p49 = scmp.eq.s32.totalorder %s12, 3
      %p50 = por %p48, %p49
      %p51 = scmp.ne.s32.totalorder %s43, %s46
      %p52 = scmp.eq.s32.totalorder %s12, 0
      %p53 = por %p51, %p52
      %p54 = scmp.ne.s32.totalorder %s43, %s46
      %p55 = scmp.eq.s32.totalorder %s17, 3
      %p56 = por %p54, %p55
      %p57 = scmp.ne.s32.totalorder %s46, %s47
      %p58 = scmp.eq.s32.totalorder %s17, 0
      %p59 = por %p57, %p58
      %p60 = scmp.ne.s32.totalorder %s46, %s47
      %p61 = scmp.eq.s32.totalorder %s18, 3
      %p62 = por %p60, %p61
      %p64 = scmp.ne.s32.totalorder %s47, %s63
      %p65 = scmp.eq.s32.totalorder %s18, 0
      %p66 = por %p64, %p65
      %s67 = ssub.s32 %s21, %s30
      %s68 = ssub.s32 %s20, %s34
      %s69 = sor.u32 %s67, %s68
      %p70 = scmp.eq.s32.totalorder %s69, 0
      %s72 = sadd.s32 %s71, 1
      %s73 = scalar_select %p70, %s71, %s72
      %p76 = pneg %p70
      %p77 = scmp.eq.s32.totalorder %s12, 3
      %p78 = por %p76, %p77
      %p79 = scmp.ne.s32.totalorder %s71, %s74
      %p80 = scmp.eq.s32.totalorder %s12, 0
      %p81 = por %p79, %p80
      %p82 = scmp.ne.s32.totalorder %s71, %s74
      %p83 = scmp.eq.s32.totalorder %s17, 3
      %p84 = por %p82, %p83
      %p85 = scmp.ne.s32.totalorder %s74, %s75
      %p86 = scmp.eq.s32.totalorder %s17, 0
      %p87 = por %p85, %p86
      %p88 = scmp.ne.s32.totalorder %s74, %s75
      %p89 = scmp.eq.s32.totalorder %s18, 3
      %p90 = por %p88, %p89
      %p92 = scmp.ne.s32.totalorder %s75, %s91
      %p93 = scmp.eq.s32.totalorder %s18, 0
      %p94 = por %p92, %p93
      %s95 = ssub.s32 %s20, %s34
      %p96 = scmp.eq.s32.totalorder %s95, 0
      %s98 = sadd.s32 %s97, 1
      %s99 = scalar_select %p96, %s97, %s98
      %p102 = pneg %p96
      %p103 = scmp.eq.s32.totalorder %s12, 3
      %p104 = por %p102, %p103
      %p105 = scmp.ne.s32.totalorder %s97, %s100
      %p106 = scmp.eq.s32.totalorder %s12, 0
      %p107 = por %p105, %p106
      %p108 = scmp.ne.s32.totalorder %s97, %s100
      %p109 = scmp.eq.s32.totalorder %s17, 3
      %p110 = por %p108, %p109
      %p111 = scmp.ne.s32.totalorder %s100, %s101
      %p112 = scmp.eq.s32.totalorder %s17, 0
      %p113 = por %p111, %p112
      %p114 = scmp.ne.s32.totalorder %s100, %s101
      %p115 = scmp.eq.s32.totalorder %s18, 3
      %p116 = por %p114, %p115
      %p118 = scmp.ne.s32.totalorder %s101, %s117
      %p119 = scmp.eq.s32.totalorder %s18, 0
      %p120 = por %p118, %p119
      %s121 = ssub.s32 %s19, %s38
      %s122 = ssub.s32 %s20, %s34
      %s123 = sor.u32 %s121, %s122
      %p124 = scmp.eq.s32.totalorder %s123, 0
      %s126 = sadd.s32 %s125, 1
      %s127 = scalar_select %p124, %s125, %s126
      %p130 = pneg %p124
      %p131 = scmp.eq.s32.totalorder %s12, 3
      %p132 = por %p130, %p131
      %p133 = scmp.ne.s32.totalorder %s125, %s128
      %p134 = scmp.eq.s32.totalorder %s12, 0
      %p135 = por %p133, %p134
      %p136 = scmp.ne.s32.totalorder %s125, %s128
      %p137 = scmp.eq.s32.totalorder %s17, 3
      %p138 = por %p136, %p137
      %p139 = scmp.ne.s32.totalorder %s128, %s129
      %p140 = scmp.eq.s32.totalorder %s17, 0
      %p141 = por %p139, %p140
      %p142 = scmp.ne.s32.totalorder %s128, %s129
      %p143 = scmp.eq.s32.totalorder %s18, 3
      %p144 = por %p142, %p143
      %p146 = scmp.ne.s32.totalorder %s129, %s145
      %p147 = scmp.eq.s32.totalorder %s18, 0
      %p148 = por %p146, %p147
      %p149 = scmp.le.s32.totalorder 1, %s12
      %p150 = scmp.lt.s32.totalorder %s12, 5
      %p151 = pnand %p149, %p150
      %p152 = pneg %p151
      // Predicated region
      $region9: #{conv2d_fused.1} parent=5 // pred_check
        _
      $region10: #{conv2d_fused.1} parent=5 // pred_check_branch
        %154 = sbr.rel (%p151) target = $region12
      $region11: #{conv2d_fused.1} parent=5 // pred_region
        %s155 = ssub.s32 %s12, 1
        // Predicated region
        $region13: #{conv2d_fused.1} parent=11 // pred_check
          %p156 = pneg %p87
        $region14: #{conv2d_fused.1} parent=11 // pred_check_branch
          %158 = sbr.rel (%p156) target = $region16
        $region15: #{conv2d_fused.1} parent=11 // pred_region
          %s159 = smul.u32 16, %s24
          %p160 = scmp.lt.s32.totalorder %s159, 15
          %s161 = scalar_select %p160, %s159, 15
          %p162 = scmp.lt.s32.totalorder %s23, 0
          %s163 = scalar_select %p162, %s23, 0
          %s164 = sadd.s32 %s163, %s161
          %s165 = smul.addr %s164, 4
          %s166 = scalar_lea.vmem %s1, %s165
          %s167 = smul.u32 16, %s24
        $region16: #{conv2d_fused.1} parent=11 // pred_fallthru
          _
        // Predicated region
        $region17: #{conv2d_fused.1} parent=11 // pred_check
          %p168 = pneg %p113
        $region18: #{conv2d_fused.1} parent=11 // pred_check_branch
          %170 = sbr.rel (%p168) target = $region20
        $region19: #{conv2d_fused.1} parent=11 // pred_region
          %p171 = scmp.lt.s32.totalorder %s23, 0
          %s172 = scalar_select %p171, %s23, 0
          %s173 = scalar_lea.vmem %s2, %s172
        $region20: #{conv2d_fused.1} parent=11 // pred_fallthru
          _
      $region12: #{conv2d_fused.1} parent=5 // pred_fallthru
        _
      %p174 = scmp.lt.s32.totalorder %s12, 4
      // Predicated region
      $region21: #{conv2d_fused.1} parent=5 // pred_check
        %p175 = pneg %p174
      $region22: #{conv2d_fused.1} parent=5 // pred_check_branch
        %177 = sbr.rel (%p175) target = $region24
      $region23: #{conv2d_fused.1} parent=5 // pred_region
        // Predicated region
        $region25: #{conv2d_fused.1} parent=23 // pred_check
          %p178 = pneg %p53
        $region26: #{conv2d_fused.1} parent=23 // pred_check_branch
          %180 = sbr.rel (%p178) target = $region28
        $region27: #{conv2d_fused.1} parent=23 // pred_region
          %s181 = smul.u32 64, %s19
          %p182 = scmp.lt.s32.totalorder %s181, 255
          %s183 = scalar_select %p182, %s181, 255
          %p184 = scmp.lt.s32.totalorder %s21, 0
          %s185 = scalar_select %p184, %s21, 0
          %s186 = sadd.s32 %s185, %s183
          %s187 = smul.addr %s186, 4
          %s188 = scalar_lea.vmem %s0, %s187
          %s189 = smul.u32 64, %s19
        $region28: #{conv2d_fused.1} parent=23 // pred_fallthru
          _
      $region24: #{conv2d_fused.1} parent=5 // pred_fallthru
        _
      %p190 = scmp.le.s32.totalorder 1, %s12
      %p191 = scmp.lt.s32.totalorder %s12, 5
      %p192 = pnand %p190, %p191
      %p193 = pneg %p192
      // Predicated region
      $region29: #{conv2d_fused.1} parent=5 // pred_check
        _
      $region30: #{conv2d_fused.1} parent=5 // pred_check_branch
        %195 = sbr.rel (%p192) target = $region32
      $region31: #{conv2d_fused.1} parent=5 // pred_region
        %s196 = ssub.s32 %s12, 1
        %s197 = smul.u32 64, %s22
        %p198 = scmp.lt.s32.totalorder %s197, 255
        %s199 = scalar_select %p198, %s197, 255
        %p200 = scmp.lt.s32.totalorder %s24, 0
        %s201 = scalar_select %p200, %s24, 0
        %s202 = sadd.s32 %s201, %s199
        %s203 = smul.addr %s202, 4
        %s204 = scalar_lea.vmem %s0, %s203
        %p205 = pneg %p59
        %p206 = pneg %p56
        %s207 = smul.u32 16, %s24
        %p208 = scmp.lt.s32.totalorder %s207, 15
        %s209 = scalar_select %p208, %s207, 15
        %p210 = scmp.lt.s32.totalorder %s23, 0
        %s211 = scalar_select %p210, %s23, 0
        %s212 = sadd.s32 %s211, %s209
        %s213 = smul.addr %s212, 4
        %s214 = scalar_lea.vmem %s1, %s213
        %p215 = pneg %p87
        %p216 = pneg %p84
        %p217 = scmp.lt.s32.totalorder %s23, 0
        %s218 = scalar_select %p217, %s23, 0
        %s219 = scalar_lea.vmem %s2, %s218
        %p220 = pneg %p113
        %p221 = pneg %p110
        %p222 = pneg %p141
        %p223 = pneg %p138
        %s224 = sand.u32 %s128, 1
        %s225 = scalar_lea.sflag [#allocation4], %s224
        %s226 = sand.u32 %s128, 1
        %s227 = smul.addr %s226, 256
        %s228 = scalar_lea.vmem [#allocation3], %s227
        %s229 = smul.u32 64, %s22
        %p230 = scmp.lt.s32.totalorder %s229, 255
        %s231 = scalar_select %p230, %s229, 255
        %p232 = scmp.lt.s32.totalorder %s24, 0
        %s233 = scalar_select %p232, %s24, 0
        %s234 = sadd.s32 %s233, %s231
        %s235 = smul.addr %s234, 4
        %s236 = scalar_lea.vmem %s0, %s235
        %s237 = smul.u32 64, %s22
        %s238 = smul.u32 16, %s24
        %p239 = scmp.lt.s32.totalorder %s238, 15
        %s240 = scalar_select %p239, %s238, 15
        %p241 = scmp.lt.s32.totalorder %s23, 0
        %s242 = scalar_select %p241, %s23, 0
        %s243 = sadd.s32 %s242, %s240
        %s244 = smul.addr %s243, 4
        %s245 = scalar_lea.vmem %s1, %s244
        %s246 = smul.u32 16, %s24
        %p247 = scmp.lt.s32.totalorder %s23, 0
        %s248 = scalar_select %p247, %s23, 0
        %s249 = scalar_lea.vmem %s2, %s248
        %s250 = smul.u32 64, %s22
        %p252 = scmp.eq.s32.totalorder %s24, 0
        // Predicated region
        $region33: #{conv2d_fused.1} parent=31 // pred_check
          %p253 = pneg %p252
        $region34: #{conv2d_fused.1} parent=31 // pred_check_branch
          %255 = sbr.rel (%p253) target = $region36
        $region35: #{conv2d_fused.1} parent=31 // pred_region
          %256 = vst [vmem:[#allocation2] sm:$0xff] 0.0
          %257 = vst [vmem:[#allocation2 + $0x8] sm:$0xff] 0.0
          %258 = vst [vmem:[#allocation2 + $0x10] sm:$0xff] 0.0
          %259 = vst [vmem:[#allocation2 + $0x18] sm:$0xff] 0.0
          %260 = vst [vmem:[#allocation2 + $0x20] sm:$0xff] 0.0
          %261 = vst [vmem:[#allocation2 + $0x28] sm:$0xff] 0.0
          %262 = vst [vmem:[#allocation2 + $0x30] sm:$0xff] 0.0
          %263 = vst [vmem:[#allocation2 + $0x38] sm:$0xff] 0.0
          %264 = vst [vmem:[#allocation2 + $0x40] sm:$0xff] 0.0
          %265 = vst [vmem:[#allocation2 + $0x48] sm:$0xff] 0.0
          %266 = vst [vmem:[#allocation2 + $0x50] sm:$0xff] 0.0
          %267 = vst [vmem:[#allocation2 + $0x58] sm:$0xff] 0.0
          %268 = vst [vmem:[#allocation2 + $0x60] sm:$0xff] 0.0
          %269 = vst [vmem:[#allocation2 + $0x68] sm:$0xff] 0.0
          %270 = vst [vmem:[#allocation2 + $0x70] sm:$0xff] 0.0
          %271 = vst [vmem:[#allocation2 + $0x78] sm:$0xff] 0.0
          %272 = vst [vmem:[#allocation2 + $0x80] sm:$0xff] 0.0
          %273 = vst [vmem:[#allocation2 + $0x88] sm:$0xff] 0.0
          %274 = vst [vmem:[#allocation2 + $0x90] sm:$0xff] 0.0
          %275 = vst [vmem:[#allocation2 + $0x98] sm:$0xff] 0.0
          %276 = vst [vmem:[#allocation2 + $0xa0] sm:$0xff] 0.0
          %277 = vst [vmem:[#allocation2 + $0xa8] sm:$0xff] 0.0
          %278 = vst [vmem:[#allocation2 + $0xb0] sm:$0xff] 0.0
          %279 = vst [vmem:[#allocation2 + $0xb8] sm:$0xff] 0.0
          %280 = vst [vmem:[#allocation2 + $0xc0] sm:$0xff] 0.0
          %281 = vst [vmem:[#allocation2 + $0xc8] sm:$0xff] 0.0
          %282 = vst [vmem:[#allocation2 + $0xd0] sm:$0xff] 0.0
          %283 = vst [vmem:[#allocation2 + $0xd8] sm:$0xff] 0.0
          %284 = vst [vmem:[#allocation2 + $0xe0] sm:$0xff] 0.0
          %285 = vst [vmem:[#allocation2 + $0xe8] sm:$0xff] 0.0
          %286 = vst [vmem:[#allocation2 + $0xf0] sm:$0xff] 0.0
          %287 = vst [vmem:[#allocation2 + $0xf8] sm:$0xff] 0.0
          %288 = vst [vmem:[#allocation2 + $0x100] sm:$0xff] 0.0
          %289 = vst [vmem:[#allocation2 + $0x108] sm:$0xff] 0.0
          %290 = vst [vmem:[#allocation2 + $0x110] sm:$0xff] 0.0
          %291 = vst [vmem:[#allocation2 + $0x118] sm:$0xff] 0.0
          %292 = vst [vmem:[#allocation2 + $0x120] sm:$0xff] 0.0
          %293 = vst [vmem:[#allocation2 + $0x128] sm:$0xff] 0.0
          %294 = vst [vmem:[#allocation2 + $0x130] sm:$0xff] 0.0
          %295 = vst [vmem:[#allocation2 + $0x138] sm:$0xff] 0.0
          %296 = vst [vmem:[#allocation2 + $0x140] sm:$0xff] 0.0
          %297 = vst [vmem:[#allocation2 + $0x148] sm:$0xff] 0.0
          %298 = vst [vmem:[#allocation2 + $0x150] sm:$0xff] 0.0
          %299 = vst [vmem:[#allocation2 + $0x158] sm:$0xff] 0.0
          %300 = vst [vmem:[#allocation2 + $0x160] sm:$0xff] 0.0
          %301 = vst [vmem:[#allocation2 + $0x168] sm:$0xff] 0.0
          %302 = vst [vmem:[#allocation2 + $0x170] sm:$0xff] 0.0
          %303 = vst [vmem:[#allocation2 + $0x178] sm:$0xff] 0.0
          %304 = vst [vmem:[#allocation2 + $0x180] sm:$0xff] 0.0
          %305 = vst [vmem:[#allocation2 + $0x188] sm:$0xff] 0.0
          %306 = vst [vmem:[#allocation2 + $0x190] sm:$0xff] 0.0
          %307 = vst [vmem:[#allocation2 + $0x198] sm:$0xff] 0.0
          %308 = vst [vmem:[#allocation2 + $0x1a0] sm:$0xff] 0.0
          %309 = vst [vmem:[#allocation2 + $0x1a8] sm:$0xff] 0.0
          %310 = vst [vmem:[#allocation2 + $0x1b0] sm:$0xff] 0.0
          %311 = vst [vmem:[#allocation2 + $0x1b8] sm:$0xff] 0.0
          %312 = vst [vmem:[#allocation2 + $0x1c0] sm:$0xff] 0.0
          %313 = vst [vmem:[#allocation2 + $0x1c8] sm:$0xff] 0.0
          %314 = vst [vmem:[#allocation2 + $0x1d0] sm:$0xff] 0.0
          %315 = vst [vmem:[#allocation2 + $0x1d8] sm:$0xff] 0.0
          %316 = vst [vmem:[#allocation2 + $0x1e0] sm:$0xff] 0.0
          %317 = vst [vmem:[#allocation2 + $0x1e8] sm:$0xff] 0.0
          %318 = vst [vmem:[#allocation2 + $0x1f0] sm:$0xff] 0.0
          %319 = vst [vmem:[#allocation2 + $0x1f8] sm:$0xff] 0.0
        $region36: #{conv2d_fused.1} parent=31 // pred_fallthru
          _
        %v320 = vld [vmem:[#allocation2] sm:$0xff]
        %v321 = vld [vmem:[#allocation2 + $0x8] sm:$0xff]
        %v322 = vld [vmem:[#allocation2 + $0x10] sm:$0xff]
        %v323 = vld [vmem:[#allocation2 + $0x18] sm:$0xff]
        %v324 = vld [vmem:[#allocation2 + $0x20] sm:$0xff]
        %v325 = vld [vmem:[#allocation2 + $0x28] sm:$0xff]
        %v326 = vld [vmem:[#allocation2 + $0x30] sm:$0xff]
        %v327 = vld [vmem:[#allocation2 + $0x38] sm:$0xff]
        %v328 = vld [vmem:[#allocation2 + $0x40] sm:$0xff]
        %v329 = vld [vmem:[#allocation2 + $0x48] sm:$0xff]
        %v330 = vld [vmem:[#allocation2 + $0x50] sm:$0xff]
        %v331 = vld [vmem:[#allocation2 + $0x58] sm:$0xff]
        %v332 = vld [vmem:[#allocation2 + $0x60] sm:$0xff]
        %v333 = vld [vmem:[#allocation2 + $0x68] sm:$0xff]
        %v334 = vld [vmem:[#allocation2 + $0x70] sm:$0xff]
        %v335 = vld [vmem:[#allocation2 + $0x78] sm:$0xff]
        %v336 = vld [vmem:[#allocation2 + $0x80] sm:$0xff]
        %v337 = vld [vmem:[#allocation2 + $0x88] sm:$0xff]
        %v338 = vld [vmem:[#allocation2 + $0x90] sm:$0xff]
        %v339 = vld [vmem:[#allocation2 + $0x98] sm:$0xff]
        %v340 = vld [vmem:[#allocation2 + $0xa0] sm:$0xff]
        %v341 = vld [vmem:[#allocation2 + $0xa8] sm:$0xff]
        %v342 = vld [vmem:[#allocation2 + $0xb0] sm:$0xff]
        %v343 = vld [vmem:[#allocation2 + $0xb8] sm:$0xff]
        %v344 = vld [vmem:[#allocation2 + $0xc0] sm:$0xff]
        %v345 = vld [vmem:[#allocation2 + $0xc8] sm:$0xff]
        %v346 = vld [vmem:[#allocation2 + $0xd0] sm:$0xff]
        %v347 = vld [vmem:[#allocation2 + $0xd8] sm:$0xff]
        %v348 = vld [vmem:[#allocation2 + $0xe0] sm:$0xff]
        %v349 = vld [vmem:[#allocation2 + $0xe8] sm:$0xff]
        %v350 = vld [vmem:[#allocation2 + $0xf0] sm:$0xff]
        %v351 = vld [vmem:[#allocation2 + $0xf8] sm:$0xff]
        %v352 = vld [vmem:[#allocation2 + $0x100] sm:$0xff]
        %v353 = vld [vmem:[#allocation2 + $0x108] sm:$0xff]
        %v354 = vld [vmem:[#allocation2 + $0x110] sm:$0xff]
        %v355 = vld [vmem:[#allocation2 + $0x118] sm:$0xff]
        %v356 = vld [vmem:[#allocation2 + $0x120] sm:$0xff]
        %v357 = vld [vmem:[#allocation2 + $0x128] sm:$0xff]
        %v358 = vld [vmem:[#allocation2 + $0x130] sm:$0xff]
        %v359 = vld [vmem:[#allocation2 + $0x138] sm:$0xff]
        %v360 = vld [vmem:[#allocation2 + $0x140] sm:$0xff]
        %v361 = vld [vmem:[#allocation2 + $0x148] sm:$0xff]
        %v362 = vld [vmem:[#allocation2 + $0x150] sm:$0xff]
        %v363 = vld [vmem:[#allocation2 + $0x158] sm:$0xff]
        %v364 = vld [vmem:[#allocation2 + $0x160] sm:$0xff]
        %v365 = vld [vmem:[#allocation2 + $0x168] sm:$0xff]
        %v366 = vld [vmem:[#allocation2 + $0x170] sm:$0xff]
        %v367 = vld [vmem:[#allocation2 + $0x178] sm:$0xff]
        %v368 = vld [vmem:[#allocation2 + $0x180] sm:$0xff]
        %v369 = vld [vmem:[#allocation2 + $0x188] sm:$0xff]
        %v370 = vld [vmem:[#allocation2 + $0x190] sm:$0xff]
        %v371 = vld [vmem:[#allocation2 + $0x198] sm:$0xff]
        %v372 = vld [vmem:[#allocation2 + $0x1a0] sm:$0xff]
        %v373 = vld [vmem:[#allocation2 + $0x1a8] sm:$0xff]
        %v374 = vld [vmem:[#allocation2 + $0x1b0] sm:$0xff]
        %v375 = vld [vmem:[#allocation2 + $0x1b8] sm:$0xff]
        %v376 = vld [vmem:[#allocation2 + $0x1c0] sm:$0xff]
        %v377 = vld [vmem:[#allocation2 + $0x1c8] sm:$0xff]
        %v378 = vld [vmem:[#allocation2 + $0x1d0] sm:$0xff]
        %v379 = vld [vmem:[#allocation2 + $0x1d8] sm:$0xff]
        %v380 = vld [vmem:[#allocation2 + $0x1e0] sm:$0xff]
        %v381 = vld [vmem:[#allocation2 + $0x1e8] sm:$0xff]
        %v382 = vld [vmem:[#allocation2 + $0x1f0] sm:$0xff]
        %v383 = vld [vmem:[#allocation2 + $0x1f8] sm:$0xff]
        %v384 = vld [vmem:[%s236] sm:$0xf]
        %v385 = vld [vmem:[%s236 + $0x4] sm:$0xf]
        %v386 = vld [vmem:[%s236 + $0x8] sm:$0xf]
        %v387 = vld [vmem:[%s236 + $0xc] sm:$0xf]
        %v388 = vld [vmem:[%s236 + $0x10] sm:$0xf]
        %v389 = vld [vmem:[%s236 + $0x14] sm:$0xf]
        %v390 = vld [vmem:[%s236 + $0x18] sm:$0xf]
        %v391 = vld [vmem:[%s236 + $0x1c] sm:$0xf]
        %v392 = vld [vmem:[%s236 + $0x20] sm:$0xf]
        %v393 = vld [vmem:[%s236 + $0x24] sm:$0xf]
        %v394 = vld [vmem:[%s236 + $0x28] sm:$0xf]
        %v395 = vld [vmem:[%s236 + $0x2c] sm:$0xf]
        %v396 = vld [vmem:[%s236 + $0x30] sm:$0xf]
        %v397 = vld [vmem:[%s236 + $0x34] sm:$0xf]
        %v398 = vld [vmem:[%s236 + $0x38] sm:$0xf]
        %v399 = vld [vmem:[%s236 + $0x3c] sm:$0xf]
        %v400 = vld [vmem:[%s236 + $0x40] sm:$0xf]
        %v401 = vld [vmem:[%s236 + $0x44] sm:$0xf]
        %v402 = vld [vmem:[%s236 + $0x48] sm:$0xf]
        %v403 = vld [vmem:[%s236 + $0x4c] sm:$0xf]
        %v404 = vld [vmem:[%s236 + $0x50] sm:$0xf]
        %v405 = vld [vmem:[%s236 + $0x54] sm:$0xf]
        %v406 = vld [vmem:[%s236 + $0x58] sm:$0xf]
        %v407 = vld [vmem:[%s236 + $0x5c] sm:$0xf]
        %v408 = vld [vmem:[%s236 + $0x60] sm:$0xf]
        %v409 = vld [vmem:[%s236 + $0x64] sm:$0xf]
        %v410 = vld [vmem:[%s236 + $0x68] sm:$0xf]
        %v411 = vld [vmem:[%s236 + $0x6c] sm:$0xf]
        %v412 = vld [vmem:[%s236 + $0x70] sm:$0xf]
        %v413 = vld [vmem:[%s236 + $0x74] sm:$0xf]
        %v414 = vld [vmem:[%s236 + $0x78] sm:$0xf]
        %v415 = vld [vmem:[%s236 + $0x7c] sm:$0xf]
        %v416 = vld [vmem:[%s236 + $0x80] sm:$0xf]
        %v417 = vld [vmem:[%s236 + $0x84] sm:$0xf]
        %v418 = vld [vmem:[%s236 + $0x88] sm:$0xf]
        %v419 = vld [vmem:[%s236 + $0x8c] sm:$0xf]
        %v420 = vld [vmem:[%s236 + $0x90] sm:$0xf]
        %v421 = vld [vmem:[%s236 + $0x94] sm:$0xf]
        %v422 = vld [vmem:[%s236 + $0x98] sm:$0xf]
        %v423 = vld [vmem:[%s236 + $0x9c] sm:$0xf]
        %v424 = vld [vmem:[%s236 + $0xa0] sm:$0xf]
        %v425 = vld [vmem:[%s236 + $0xa4] sm:$0xf]
        %v426 = vld [vmem:[%s236 + $0xa8] sm:$0xf]
        %v427 = vld [vmem:[%s236 + $0xac] sm:$0xf]
        %v428 = vld [vmem:[%s236 + $0xb0] sm:$0xf]
        %v429 = vld [vmem:[%s236 + $0xb4] sm:$0xf]
        %v430 = vld [vmem:[%s236 + $0xb8] sm:$0xf]
        %v431 = vld [vmem:[%s236 + $0xbc] sm:$0xf]
        %v432 = vld [vmem:[%s236 + $0xc0] sm:$0xf]
        %v433 = vld [vmem:[%s236 + $0xc4] sm:$0xf]
        %v434 = vld [vmem:[%s236 + $0xc8] sm:$0xf]
        %v435 = vld [vmem:[%s236 + $0xcc] sm:$0xf]
        %v436 = vld [vmem:[%s236 + $0xd0] sm:$0xf]
        %v437 = vld [vmem:[%s236 + $0xd4] sm:$0xf]
        %v438 = vld [vmem:[%s236 + $0xd8] sm:$0xf]
        %v439 = vld [vmem:[%s236 + $0xdc] sm:$0xf]
        %v440 = vld [vmem:[%s236 + $0xe0] sm:$0xf]
        %v441 = vld [vmem:[%s236 + $0xe4] sm:$0xf]
        %v442 = vld [vmem:[%s236 + $0xe8] sm:$0xf]
        %v443 = vld [vmem:[%s236 + $0xec] sm:$0xf]
        %v444 = vld [vmem:[%s236 + $0xf0] sm:$0xf]
        %v445 = vld [vmem:[%s236 + $0xf4] sm:$0xf]
        %v446 = vld [vmem:[%s236 + $0xf8] sm:$0xf]
        %v447 = vld [vmem:[%s236 + $0xfc] sm:$0xf]
        %v448 = vld [vmem:[%s245] sm:$0xf]
        %v449 = vld [vmem:[%s245 + $0x4] sm:$0xf]
        %v450 = vld [vmem:[%s245 + $0x8] sm:$0xf]
        %v451 = vld [vmem:[%s245 + $0xc] sm:$0xf]
        %v452 = vld [vmem:[%s245 + $0x10] sm:$0xf]
        %v453 = vld [vmem:[%s245 + $0x14] sm:$0xf]
        %v454 = vld [vmem:[%s245 + $0x18] sm:$0xf]
        %v455 = vld [vmem:[%s245 + $0x1c] sm:$0xf]
        %v456 = vld [vmem:[%s245 + $0x20] sm:$0xf]
        %v457 = vld [vmem:[%s245 + $0x24] sm:$0xf]
        %v458 = vld [vmem:[%s245 + $0x28] sm:$0xf]
        %v459 = vld [vmem:[%s245 + $0x2c] sm:$0xf]
        %v460 = vld [vmem:[%s245 + $0x30] sm:$0xf]
        %v461 = vld [vmem:[%s245 + $0x34] sm:$0xf]
        %v462 = vld [vmem:[%s245 + $0x38] sm:$0xf]
        %v463 = vld [vmem:[%s245 + $0x3c] sm:$0xf]
        %v528 = vunpack.c.l.b16 %v384
        %v529 = vunpack.c.l.b16 %v385
        %v530 = vunpack.c.l.b16 %v386
        %v531 = vunpack.c.l.b16 %v387
        %v532 = vunpack.c.l.b16 %v388
        %v533 = vunpack.c.l.b16 %v389
        %v534 = vunpack.c.l.b16 %v390
        %v535 = vunpack.c.l.b16 %v391
        %v536 = vunpack.c.l.b16 %v392
        %v537 = vunpack.c.l.b16 %v393
        %v538 = vunpack.c.l.b16 %v394
        %v539 = vunpack.c.l.b16 %v395
        %v540 = vunpack.c.l.b16 %v396
        %v541 = vunpack.c.l.b16 %v397
        %v542 = vunpack.c.l.b16 %v398
        %v543 = vunpack.c.l.b16 %v399
        %v544 = vunpack.c.l.b16 %v400
        %v545 = vunpack.c.l.b16 %v401
        %v546 = vunpack.c.l.b16 %v402
        %v547 = vunpack.c.l.b16 %v403
        %v548 = vunpack.c.l.b16 %v404
        %v549 = vunpack.c.l.b16 %v405
        %v550 = vunpack.c.l.b16 %v406
        %v551 = vunpack.c.l.b16 %v407
        %v552 = vunpack.c.l.b16 %v408
        %v553 = vunpack.c.l.b16 %v409
        %v554 = vunpack.c.l.b16 %v410
        %v555 = vunpack.c.l.b16 %v411
        %v556 = vunpack.c.l.b16 %v412
        %v557 = vunpack.c.l.b16 %v413
        %v558 = vunpack.c.l.b16 %v414
        %v559 = vunpack.c.l.b16 %v415
        %v560 = vunpack.c.l.b16 %v416
        %v561 = vunpack.c.l.b16 %v417
        %v562 = vunpack.c.l.b16 %v418
        %v563 = vunpack.c.l.b16 %v419
        %v564 = vunpack.c.l.b16 %v420
        %v565 = vunpack.c.l.b16 %v421
        %v566 = vunpack.c.l.b16 %v422
        %v567 = vunpack.c.l.b16 %v423
        %v568 = vunpack.c.l.b16 %v424
        %v569 = vunpack.c.l.b16 %v425
        %v570 = vunpack.c.l.b16 %v426
        %v571 = vunpack.c.l.b16 %v427
        %v572 = vunpack.c.l.b16 %v428
        %v573 = vunpack.c.l.b16 %v429
        %v574 = vunpack.c.l.b16 %v430
        %v575 = vunpack.c.l.b16 %v431
        %v576 = vunpack.c.l.b16 %v432
        %v577 = vunpack.c.l.b16 %v433
        %v578 = vunpack.c.l.b16 %v434
        %v579 = vunpack.c.l.b16 %v435
        %v580 = vunpack.c.l.b16 %v436
        %v581 = vunpack.c.l.b16 %v437
        %v582 = vunpack.c.l.b16 %v438
        %v583 = vunpack.c.l.b16 %v439
        %v584 = vunpack.c.l.b16 %v440
        %v585 = vunpack.c.l.b16 %v441
        %v586 = vunpack.c.l.b16 %v442
        %v587 = vunpack.c.l.b16 %v443
        %v588 = vunpack.c.l.b16 %v444
        %v589 = vunpack.c.l.b16 %v445
        %v590 = vunpack.c.l.b16 %v446
        %v591 = vunpack.c.l.b16 %v447
        %v592 = vpack.c.b16 %v529, %v528
        %v593 = vpack.c.b16 %v531, %v530
        %v594 = vpack.c.b16 %v533, %v532
        %v595 = vpack.c.b16 %v535, %v534
        %v596 = vpack.c.b16 %v537, %v536
        %v597 = vpack.c.b16 %v539, %v538
        %v598 = vpack.c.b16 %v541, %v540
        %v599 = vpack.c.b16 %v543, %v542
        %v600 = vpack.c.b16 %v545, %v544
        %v601 = vpack.c.b16 %v547, %v546
        %v602 = vpack.c.b16 %v549, %v548
        %v603 = vpack.c.b16 %v551, %v550
        %v604 = vpack.c.b16 %v553, %v552
        %v605 = vpack.c.b16 %v555, %v554
        %v606 = vpack.c.b16 %v557, %v556
        %v607 = vpack.c.b16 %v559, %v558
        %v608 = vpack.c.b16 %v561, %v560
        %v609 = vpack.c.b16 %v563, %v562
        %v610 = vpack.c.b16 %v565, %v564
        %v611 = vpack.c.b16 %v567, %v566
        %v612 = vpack.c.b16 %v569, %v568
        %v613 = vpack.c.b16 %v571, %v570
        %v614 = vpack.c.b16 %v573, %v572
        %v615 = vpack.c.b16 %v575, %v574
        %v616 = vpack.c.b16 %v577, %v576
        %v617 = vpack.c.b16 %v579, %v578
        %v618 = vpack.c.b16 %v581, %v580
        %v619 = vpack.c.b16 %v583, %v582
        %v620 = vpack.c.b16 %v585, %v584
        %v621 = vpack.c.b16 %v587, %v586
        %v622 = vpack.c.b16 %v589, %v588
        %v623 = vpack.c.b16 %v591, %v590
        %v672 = vunpack.c.l.b16 %v448
        %v673 = vunpack.c.l.b16 %v449
        %v674 = vunpack.c.l.b16 %v450
        %v675 = vunpack.c.l.b16 %v451
        %v676 = vunpack.c.l.b16 %v452
        %v677 = vunpack.c.l.b16 %v453
        %v678 = vunpack.c.l.b16 %v454
        %v679 = vunpack.c.l.b16 %v455
        %v680 = vunpack.c.l.b16 %v456
        %v681 = vunpack.c.l.b16 %v457
        %v682 = vunpack.c.l.b16 %v458
        %v683 = vunpack.c.l.b16 %v459
        %v684 = vunpack.c.l.b16 %v460
        %v685 = vunpack.c.l.b16 %v461
        %v686 = vunpack.c.l.b16 %v462
        %v687 = vunpack.c.l.b16 %v463
        %v688 = vpack.c.b16 %v673, %v672
        %v689 = vpack.c.b16 %v675, %v674
        %v690 = vpack.c.b16 %v677, %v676
        %v691 = vpack.c.b16 %v679, %v678
        %v692 = vpack.c.b16 %v681, %v680
        %v693 = vpack.c.b16 %v683, %v682
        %v694 = vpack.c.b16 %v685, %v684
        %v695 = vpack.c.b16 %v687, %v686
        %704 = vmatprep.subr.bf16.mxu0 0
        %705 = vmatpush1.bf16.msra.mxu0 %v695
        %706 = vmatprep.subr.bf16.mxu0 0
        %707 = vmatpush1.bf16.msra.mxu0 %v694
        %708 = vmatprep.subr.bf16.mxu0 0
        %709 = vmatpush1.bf16.msra.mxu0 %v693
        %710 = vmatprep.subr.bf16.mxu0 0
        %711 = vmatpush1.bf16.msra.mxu0 %v692
        %712 = vmatprep.subr.bf16.mxu0 0
        %713 = vmatpush1.bf16.msra.mxu0 %v691
        %714 = vmatprep.subr.bf16.mxu0 0
        %715 = vmatpush1.bf16.msra.mxu0 %v690
        %716 = vmatprep.subr.bf16.mxu0 0
        %717 = vmatpush1.bf16.msra.mxu0 %v689
        %718 = vmatprep.subr.bf16.mxu0 0
        %719 = vmatpush1.bf16.msra.mxu0 %v688
        %720 = vmatprep.subr.bf16.mxu0 0
        %721 = vmatpush2.bf16.msra.mxu0 0
        %722 = vmatprep.subr.bf16.mxu0 0
        %723 = vmatpush2.bf16.msra.mxu0 0
        %724 = vmatprep.subr.bf16.mxu0 0
        %725 = vmatpush2.bf16.msra.mxu0 0
        %726 = vmatprep.subr.bf16.mxu0 0
        %727 = vmatpush2.bf16.msra.mxu0 0
        %728 = vmatprep.subr.bf16.mxu0 0
        %729 = vmatpush2.bf16.msra.mxu0 0
        %730 = vmatprep.subr.bf16.mxu0 0
        %731 = vmatpush2.bf16.msra.mxu0 0
        %732 = vmatprep.subr.bf16.mxu0 0
        %733 = vmatpush2.bf16.msra.mxu0 0
        %734 = vmatprep.subr.bf16.mxu0 0
        %735 = vmatpush2.bf16.msra.mxu0 0
        %736 = vmatprep.mubr.bf16.mxu0 0
        %737 = vmatmul.mubr.bf16.gmra.mxu0 %v592
        %v738 = vpop.f32.mrf.mxu0
        %v739 = vadd.f32 0.0, %v738
        %v740 = vpop.f32.mrf.mxu0
        %v741 = vpop.f32.mrf.mxu0
        %v742 = vadd.f32 0.0, %v741
        %v743 = vpop.f32.mrf.mxu0
        %744 = vmatprep.mubr.bf16.mxu0 0
        %745 = vmatmul.mubr.bf16.gmra.mxu0 %v593
        %v746 = vpop.f32.mrf.mxu0
        %v747 = vadd.f32 0.0, %v746
        %v748 = vpop.f32.mrf.mxu0
        %v749 = vpop.f32.mrf.mxu0
        %v750 = vadd.f32 0.0, %v749
        %v751 = vpop.f32.mrf.mxu0
        %752 = vmatprep.mubr.bf16.mxu0 0
        %753 = vmatmul.mubr.bf16.gmra.mxu0 %v594
        %v754 = vpop.f32.mrf.mxu0
        %v755 = vadd.f32 0.0, %v754
        %v756 = vpop.f32.mrf.mxu0
        %v757 = vpop.f32.mrf.mxu0
        %v758 = vadd.f32 0.0, %v757
        %v759 = vpop.f32.mrf.mxu0
        %760 = vmatprep.mubr.bf16.mxu0 0
        %761 = vmatmul.mubr.bf16.gmra.mxu0 %v595
        %v762 = vpop.f32.mrf.mxu0
        %v763 = vadd.f32 0.0, %v762
        %v764 = vpop.f32.mrf.mxu0
        %v765 = vpop.f32.mrf.mxu0
        %v766 = vadd.f32 0.0, %v765
        %v767 = vpop.f32.mrf.mxu0
        %768 = vmatprep.mubr.bf16.mxu0 0
        %769 = vmatmul.mubr.bf16.gmra.mxu0 %v596
        %v770 = vpop.f32.mrf.mxu0
        %v771 = vadd.f32 0.0, %v770
        %v772 = vpop.f32.mrf.mxu0
        %v773 = vpop.f32.mrf.mxu0
        %v774 = vadd.f32 0.0, %v773
        %v775 = vpop.f32.mrf.mxu0
        %776 = vmatprep.mubr.bf16.mxu0 0
        %777 = vmatmul.mubr.bf16.gmra.mxu0 %v597
        %v778 = vpop.f32.mrf.mxu0
        %v779 = vadd.f32 0.0, %v778
        %v780 = vpop.f32.mrf.mxu0
        %v781 = vpop.f32.mrf.mxu0
        %v782 = vadd.f32 0.0, %v781
        %v783 = vpop.f32.mrf.mxu0
        %784 = vmatprep.mubr.bf16.mxu0 0
        %785 = vmatmul.mubr.bf16.gmra.mxu0 %v598
        %v786 = vpop.f32.mrf.mxu0
        %v787 = vadd.f32 0.0, %v786
        %v788 = vpop.f32.mrf.mxu0
        %v789 = vpop.f32.mrf.mxu0
        %v790 = vadd.f32 0.0, %v789
        %v791 = vpop.f32.mrf.mxu0
        %792 = vmatprep.mubr.bf16.mxu0 0
        %793 = vmatmul.mubr.bf16.gmra.mxu0 %v599
        %v794 = vpop.f32.mrf.mxu0
        %v795 = vadd.f32 0.0, %v794
        %v796 = vpop.f32.mrf.mxu0
        %v797 = vpop.f32.mrf.mxu0
        %v798 = vadd.f32 0.0, %v797
        %v799 = vpop.f32.mrf.mxu0
        %800 = vmatprep.mubr.bf16.mxu0 0
        %801 = vmatmul.mubr.bf16.gmra.mxu0 %v600
        %v802 = vpop.f32.mrf.mxu0
        %v803 = vadd.f32 0.0, %v802
        %v804 = vpop.f32.mrf.mxu0
        %v805 = vpop.f32.mrf.mxu0
        %v806 = vadd.f32 0.0, %v805
        %v807 = vpop.f32.mrf.mxu0
        %808 = vmatprep.mubr.bf16.mxu0 0
        %809 = vmatmul.mubr.bf16.gmra.mxu0 %v601
        %v810 = vpop.f32.mrf.mxu0
        %v811 = vadd.f32 0.0, %v810
        %v812 = vpop.f32.mrf.mxu0
        %v813 = vpop.f32.mrf.mxu0
        %v814 = vadd.f32 0.0, %v813
        %v815 = vpop.f32.mrf.mxu0
        %816 = vmatprep.mubr.bf16.mxu0 0
        %817 = vmatmul.mubr.bf16.gmra.mxu0 %v602
        %v818 = vpop.f32.mrf.mxu0
        %v819 = vadd.f32 0.0, %v818
        %v820 = vpop.f32.mrf.mxu0
        %v821 = vpop.f32.mrf.mxu0
        %v822 = vadd.f32 0.0, %v821
        %v823 = vpop.f32.mrf.mxu0
        %824 = vmatprep.mubr.bf16.mxu0 0
        %825 = vmatmul.mubr.bf16.gmra.mxu0 %v603
        %v826 = vpop.f32.mrf.mxu0
        %v827 = vadd.f32 0.0, %v826
        %v828 = vpop.f32.mrf.mxu0
        %v829 = vpop.f32.mrf.mxu0
        %v830 = vadd.f32 0.0, %v829
        %v831 = vpop.f32.mrf.mxu0
        %832 = vmatprep.mubr.bf16.mxu0 0
        %833 = vmatmul.mubr.bf16.gmra.mxu0 %v604
        %v834 = vpop.f32.mrf.mxu0
        %v835 = vadd.f32 0.0, %v834
        %v836 = vpop.f32.mrf.mxu0
        %v837 = vpop.f32.mrf.mxu0
        %v838 = vadd.f32 0.0, %v837
        %v839 = vpop.f32.mrf.mxu0
        %840 = vmatprep.mubr.bf16.mxu0 0
        %841 = vmatmul.mubr.bf16.gmra.mxu0 %v605
        %v842 = vpop.f32.mrf.mxu0
        %v843 = vadd.f32 0.0, %v842
        %v844 = vpop.f32.mrf.mxu0
        %v845 = vpop.f32.mrf.mxu0
        %v846 = vadd.f32 0.0, %v845
        %v847 = vpop.f32.mrf.mxu0
        %848 = vmatprep.mubr.bf16.mxu0 0
        %849 = vmatmul.mubr.bf16.gmra.mxu0 %v606
        %v850 = vpop.f32.mrf.mxu0
        %v851 = vadd.f32 0.0, %v850
        %v852 = vpop.f32.mrf.mxu0
        %v853 = vpop.f32.mrf.mxu0
        %v854 = vadd.f32 0.0, %v853
        %v855 = vpop.f32.mrf.mxu0
        %856 = vmatprep.mubr.bf16.mxu0 0
        %857 = vmatmul.mubr.bf16.gmra.mxu0 %v607
        %v858 = vpop.f32.mrf.mxu0
        %v859 = vadd.f32 0.0, %v858
        %v860 = vpop.f32.mrf.mxu0
        %v861 = vpop.f32.mrf.mxu0
        %v862 = vadd.f32 0.0, %v861
        %v863 = vpop.f32.mrf.mxu0
        %864 = vmatprep.mubr.bf16.mxu0 0
        %865 = vmatmul.mubr.bf16.gmra.mxu0 %v608
        %v866 = vpop.f32.mrf.mxu0
        %v867 = vadd.f32 0.0, %v866
        %v868 = vpop.f32.mrf.mxu0
        %v869 = vpop.f32.mrf.mxu0
        %v870 = vadd.f32 0.0, %v869
        %v871 = vpop.f32.mrf.mxu0
        %872 = vmatprep.mubr.bf16.mxu0 0
        %873 = vmatmul.mubr.bf16.gmra.mxu0 %v609
        %v874 = vpop.f32.mrf.mxu0
        %v875 = vadd.f32 0.0, %v874
        %v876 = vpop.f32.mrf.mxu0
        %v877 = vpop.f32.mrf.mxu0
        %v878 = vadd.f32 0.0, %v877
        %v879 = vpop.f32.mrf.mxu0
        %880 = vmatprep.mubr.bf16.mxu0 0
        %881 = vmatmul.mubr.bf16.gmra.mxu0 %v610
        %v882 = vpop.f32.mrf.mxu0
        %v883 = vadd.f32 0.0, %v882
        %v884 = vpop.f32.mrf.mxu0
        %v885 = vpop.f32.mrf.mxu0
        %v886 = vadd.f32 0.0, %v885
        %v887 = vpop.f32.mrf.mxu0
        %888 = vmatprep.mubr.bf16.mxu0 0
        %889 = vmatmul.mubr.bf16.gmra.mxu0 %v611
        %v890 = vpop.f32.mrf.mxu0
        %v891 = vadd.f32 0.0, %v890
        %v892 = vpop.f32.mrf.mxu0
        %v893 = vpop.f32.mrf.mxu0
        %v894 = vadd.f32 0.0, %v893
        %v895 = vpop.f32.mrf.mxu0
        %896 = vmatprep.mubr.bf16.mxu0 0
        %897 = vmatmul.mubr.bf16.gmra.mxu0 %v612
        %v898 = vpop.f32.mrf.mxu0
        %v899 = vadd.f32 0.0, %v898
        %v900 = vpop.f32.mrf.mxu0
        %v901 = vpop.f32.mrf.mxu0
        %v902 = vadd.f32 0.0, %v901
        %v903 = vpop.f32.mrf.mxu0
        %904 = vmatprep.mubr.bf16.mxu0 0
        %905 = vmatmul.mubr.bf16.gmra.mxu0 %v613
        %v906 = vpop.f32.mrf.mxu0
        %v907 = vadd.f32 0.0, %v906
        %v908 = vpop.f32.mrf.mxu0
        %v909 = vpop.f32.mrf.mxu0
        %v910 = vadd.f32 0.0, %v909
        %v911 = vpop.f32.mrf.mxu0
        %912 = vmatprep.mubr.bf16.mxu0 0
        %913 = vmatmul.mubr.bf16.gmra.mxu0 %v614
        %v914 = vpop.f32.mrf.mxu0
        %v915 = vadd.f32 0.0, %v914
        %v916 = vpop.f32.mrf.mxu0
        %v917 = vpop.f32.mrf.mxu0
        %v918 = vadd.f32 0.0, %v917
        %v919 = vpop.f32.mrf.mxu0
        %920 = vmatprep.mubr.bf16.mxu0 0
        %921 = vmatmul.mubr.bf16.gmra.mxu0 %v615
        %v922 = vpop.f32.mrf.mxu0
        %v923 = vadd.f32 0.0, %v922
        %v924 = vpop.f32.mrf.mxu0
        %v925 = vpop.f32.mrf.mxu0
        %v926 = vadd.f32 0.0, %v925
        %v927 = vpop.f32.mrf.mxu0
        %928 = vmatprep.mubr.bf16.mxu0 0
        %929 = vmatmul.mubr.bf16.gmra.mxu0 %v616
        %v930 = vpop.f32.mrf.mxu0
        %v931 = vadd.f32 0.0, %v930
        %v932 = vpop.f32.mrf.mxu0
        %v933 = vpop.f32.mrf.mxu0
        %v934 = vadd.f32 0.0, %v933
        %v935 = vpop.f32.mrf.mxu0
        %936 = vmatprep.mubr.bf16.mxu0 0
        %937 = vmatmul.mubr.bf16.gmra.mxu0 %v617
        %v938 = vpop.f32.mrf.mxu0
        %v939 = vadd.f32 0.0, %v938
        %v940 = vpop.f32.mrf.mxu0
        %v941 = vpop.f32.mrf.mxu0
        %v942 = vadd.f32 0.0, %v941
        %v943 = vpop.f32.mrf.mxu0
        %944 = vmatprep.mubr.bf16.mxu0 0
        %945 = vmatmul.mubr.bf16.gmra.mxu0 %v618
        %v946 = vpop.f32.mrf.mxu0
        %v947 = vadd.f32 0.0, %v946
        %v948 = vpop.f32.mrf.mxu0
        %v949 = vpop.f32.mrf.mxu0
        %v950 = vadd.f32 0.0, %v949
        %v951 = vpop.f32.mrf.mxu0
        %952 = vmatprep.mubr.bf16.mxu0 0
        %953 = vmatmul.mubr.bf16.gmra.mxu0 %v619
        %v954 = vpop.f32.mrf.mxu0
        %v955 = vadd.f32 0.0, %v954
        %v956 = vpop.f32.mrf.mxu0
        %v957 = vpop.f32.mrf.mxu0
        %v958 = vadd.f32 0.0, %v957
        %v959 = vpop.f32.mrf.mxu0
        %960 = vmatprep.mubr.bf16.mxu0 0
        %961 = vmatmul.mubr.bf16.gmra.mxu0 %v620
        %v962 = vpop.f32.mrf.mxu0
        %v963 = vadd.f32 0.0, %v962
        %v964 = vpop.f32.mrf.mxu0
        %v965 = vpop.f32.mrf.mxu0
        %v966 = vadd.f32 0.0, %v965
        %v967 = vpop.f32.mrf.mxu0
        %968 = vmatprep.mubr.bf16.mxu0 0
        %969 = vmatmul.mubr.bf16.gmra.mxu0 %v621
        %v970 = vpop.f32.mrf.mxu0
        %v971 = vadd.f32 0.0, %v970
        %v972 = vpop.f32.mrf.mxu0
        %v973 = vpop.f32.mrf.mxu0
        %v974 = vadd.f32 0.0, %v973
        %v975 = vpop.f32.mrf.mxu0
        %976 = vmatprep.mubr.bf16.mxu0 0
        %977 = vmatmul.mubr.bf16.gmra.mxu0 %v622
        %v978 = vpop.f32.mrf.mxu0
        %v979 = vadd.f32 0.0, %v978
        %v980 = vpop.f32.mrf.mxu0
        %v981 = vpop.f32.mrf.mxu0
        %v982 = vadd.f32 0.0, %v981
        %v983 = vpop.f32.mrf.mxu0
        %984 = vmatprep.mubr.bf16.mxu0 0
        %985 = vmatmul.mubr.bf16.gmra.mxu0 %v623
        %v986 = vpop.f32.mrf.mxu0
        %v987 = vadd.f32 0.0, %v986
        %v988 = vpop.f32.mrf.mxu0
        %v989 = vpop.f32.mrf.mxu0
        %v990 = vadd.f32 0.0, %v989
        %v991 = vpop.f32.mrf.mxu0
        %992 = vdwg.mxu0
        %v993 = vadd.f32 %v320, %v739
        %v994 = vadd.f32 %v321, %v742
        %v995 = vadd.f32 %v322, %v747
        %v996 = vadd.f32 %v323, %v750
        %v997 = vadd.f32 %v324, %v755
        %v998 = vadd.f32 %v325, %v758
        %v999 = vadd.f32 %v326, %v763
        %v1000 = vadd.f32 %v327, %v766
        %v1001 = vadd.f32 %v328, %v771
        %v1002 = vadd.f32 %v329, %v774
        %v1003 = vadd.f32 %v330, %v779
        %v1004 = vadd.f32 %v331, %v782
        %v1005 = vadd.f32 %v332, %v787
        %v1006 = vadd.f32 %v333, %v790
        %v1007 = vadd.f32 %v334, %v795
        %v1008 = vadd.f32 %v335, %v798
        %v1009 = vadd.f32 %v336, %v803
        %v1010 = vadd.f32 %v337, %v806
        %v1011 = vadd.f32 %v338, %v811
        %v1012 = vadd.f32 %v339, %v814
        %v1013 = vadd.f32 %v340, %v819
        %v1014 = vadd.f32 %v341, %v822
        %v1015 = vadd.f32 %v342, %v827
        %v1016 = vadd.f32 %v343, %v830
        %v1017 = vadd.f32 %v344, %v835
        %v1018 = vadd.f32 %v345, %v838
        %v1019 = vadd.f32 %v346, %v843
        %v1020 = vadd.f32 %v347, %v846
        %v1021 = vadd.f32 %v348, %v851
        %v1022 = vadd.f32 %v349, %v854
        %v1023 = vadd.f32 %v350, %v859
        %v1024 = vadd.f32 %v351, %v862
        %v1025 = vadd.f32 %v352, %v867
        %v1026 = vadd.f32 %v353, %v870
        %v1027 = vadd.f32 %v354, %v875
        %v1028 = vadd.f32 %v355, %v878
        %v1029 = vadd.f32 %v356, %v883
        %v1030 = vadd.f32 %v357, %v886
        %v1031 = vadd.f32 %v358, %v891
        %v1032 = vadd.f32 %v359, %v894
        %v1033 = vadd.f32 %v360, %v899
        %v1034 = vadd.f32 %v361, %v902
        %v1035 = vadd.f32 %v362, %v907
        %v1036 = vadd.f32 %v363, %v910
        %v1037 = vadd.f32 %v364, %v915
        %v1038 = vadd.f32 %v365, %v918
        %v1039 = vadd.f32 %v366, %v923
        %v1040 = vadd.f32 %v367, %v926
        %v1041 = vadd.f32 %v368, %v931
        %v1042 = vadd.f32 %v369, %v934
        %v1043 = vadd.f32 %v370, %v939
        %v1044 = vadd.f32 %v371, %v942
        %v1045 = vadd.f32 %v372, %v947
        %v1046 = vadd.f32 %v373, %v950
        %v1047 = vadd.f32 %v374, %v955
        %v1048 = vadd.f32 %v375, %v958
        %v1049 = vadd.f32 %v376, %v963
        %v1050 = vadd.f32 %v377, %v966
        %v1051 = vadd.f32 %v378, %v971
        %v1052 = vadd.f32 %v379, %v974
        %v1053 = vadd.f32 %v380, %v979
        %v1054 = vadd.f32 %v381, %v982
        %v1055 = vadd.f32 %v382, %v987
        %v1056 = vadd.f32 %v383, %v990
        %1057 = vst [vmem:[#allocation2] sm:$0xff] %v993
        %1058 = vst [vmem:[#allocation2 + $0x8] sm:$0xff] %v994
        %1059 = vst [vmem:[#allocation2 + $0x10] sm:$0xff] %v995
        %1060 = vst [vmem:[#allocation2 + $0x18] sm:$0xff] %v996
        %1061 = vst [vmem:[#allocation2 + $0x20] sm:$0xff] %v997
        %1062 = vst [vmem:[#allocation2 + $0x28] sm:$0xff] %v998
        %1063 = vst [vmem:[#allocation2 + $0x30] sm:$0xff] %v999
        %1064 = vst [vmem:[#allocation2 + $0x38] sm:$0xff] %v1000
        %1065 = vst [vmem:[#allocation2 + $0x40] sm:$0xff] %v1001
        %1066 = vst [vmem:[#allocation2 + $0x48] sm:$0xff] %v1002
        %1067 = vst [vmem:[#allocation2 + $0x50] sm:$0xff] %v1003
        %1068 = vst [vmem:[#allocation2 + $0x58] sm:$0xff] %v1004
        %1069 = vst [vmem:[#allocation2 + $0x60] sm:$0xff] %v1005
        %1070 = vst [vmem:[#allocation2 + $0x68] sm:$0xff] %v1006
        %1071 = vst [vmem:[#allocation2 + $0x70] sm:$0xff] %v1007
        %1072 = vst [vmem:[#allocation2 + $0x78] sm:$0xff] %v1008
        %1073 = vst [vmem:[#allocation2 + $0x80] sm:$0xff] %v1009
        %1074 = vst [vmem:[#allocation2 + $0x88] sm:$0xff] %v1010
        %1075 = vst [vmem:[#allocation2 + $0x90] sm:$0xff] %v1011
        %1076 = vst [vmem:[#allocation2 + $0x98] sm:$0xff] %v1012
        %1077 = vst [vmem:[#allocation2 + $0xa0] sm:$0xff] %v1013
        %1078 = vst [vmem:[#allocation2 + $0xa8] sm:$0xff] %v1014
        %1079 = vst [vmem:[#allocation2 + $0xb0] sm:$0xff] %v1015
        %1080 = vst [vmem:[#allocation2 + $0xb8] sm:$0xff] %v1016
        %1081 = vst [vmem:[#allocation2 + $0xc0] sm:$0xff] %v1017
        %1082 = vst [vmem:[#allocation2 + $0xc8] sm:$0xff] %v1018
        %1083 = vst [vmem:[#allocation2 + $0xd0] sm:$0xff] %v1019
        %1084 = vst [vmem:[#allocation2 + $0xd8] sm:$0xff] %v1020
        %1085 = vst [vmem:[#allocation2 + $0xe0] sm:$0xff] %v1021
        %1086 = vst [vmem:[#allocation2 + $0xe8] sm:$0xff] %v1022
        %1087 = vst [vmem:[#allocation2 + $0xf0] sm:$0xff] %v1023
        %1088 = vst [vmem:[#allocation2 + $0xf8] sm:$0xff] %v1024
        %1089 = vst [vmem:[#allocation2 + $0x100] sm:$0xff] %v1025
        %1090 = vst [vmem:[#allocation2 + $0x108] sm:$0xff] %v1026
        %1091 = vst [vmem:[#allocation2 + $0x110] sm:$0xff] %v1027
        %1092 = vst [vmem:[#allocation2 + $0x118] sm:$0xff] %v1028
        %1093 = vst [vmem:[#allocation2 + $0x120] sm:$0xff] %v1029
        %1094 = vst [vmem:[#allocation2 + $0x128] sm:$0xff] %v1030
        %1095 = vst [vmem:[#allocation2 + $0x130] sm:$0xff] %v1031
        %1096 = vst [vmem:[#allocation2 + $0x138] sm:$0xff] %v1032
        %1097 = vst [vmem:[#allocation2 + $0x140] sm:$0xff] %v1033
        %1098 = vst [vmem:[#allocation2 + $0x148] sm:$0xff] %v1034
        %1099 = vst [vmem:[#allocation2 + $0x150] sm:$0xff] %v1035
        %1100 = vst [vmem:[#allocation2 + $0x158] sm:$0xff] %v1036
        %1101 = vst [vmem:[#allocation2 + $0x160] sm:$0xff] %v1037
        %1102 = vst [vmem:[#allocation2 + $0x168] sm:$0xff] %v1038
        %1103 = vst [vmem:[#allocation2 + $0x170] sm:$0xff] %v1039
        %1104 = vst [vmem:[#allocation2 + $0x178] sm:$0xff] %v1040
        %1105 = vst [vmem:[#allocation2 + $0x180] sm:$0xff] %v1041
        %1106 = vst [vmem:[#allocation2 + $0x188] sm:$0xff] %v1042
        %1107 = vst [vmem:[#allocation2 + $0x190] sm:$0xff] %v1043
        %1108 = vst [vmem:[#allocation2 + $0x198] sm:$0xff] %v1044
        %1109 = vst [vmem:[#allocation2 + $0x1a0] sm:$0xff] %v1045
        %1110 = vst [vmem:[#allocation2 + $0x1a8] sm:$0xff] %v1046
        %1111 = vst [vmem:[#allocation2 + $0x1b0] sm:$0xff] %v1047
        %1112 = vst [vmem:[#allocation2 + $0x1b8] sm:$0xff] %v1048
        %1113 = vst [vmem:[#allocation2 + $0x1c0] sm:$0xff] %v1049
        %1114 = vst [vmem:[#allocation2 + $0x1c8] sm:$0xff] %v1050
        %1115 = vst [vmem:[#allocation2 + $0x1d0] sm:$0xff] %v1051
        %1116 = vst [vmem:[#allocation2 + $0x1d8] sm:$0xff] %v1052
        %1117 = vst [vmem:[#allocation2 + $0x1e0] sm:$0xff] %v1053
        %1118 = vst [vmem:[#allocation2 + $0x1e8] sm:$0xff] %v1054
        %1119 = vst [vmem:[#allocation2 + $0x1f0] sm:$0xff] %v1055
        %1120 = vst [vmem:[#allocation2 + $0x1f8] sm:$0xff] %v1056
        // Predicated region
        $region37: #{conv2d_fused.1} parent=31 // pred_check
          %p1121 = pneg %p252
        $region38: #{conv2d_fused.1} parent=31 // pred_check_branch
          %1123 = sbr.rel (%p1121) target = $region40
        $region39: #{conv2d_fused.1} parent=31 // pred_region
          %v1124 = vld [vmem:[#allocation2] sm:$0xff]
          %v1125 = vld [vmem:[#allocation2 + $0x8] sm:$0xff]
          %v1126 = vld [vmem:[#allocation2 + $0x10] sm:$0xff]
          %v1127 = vld [vmem:[#allocation2 + $0x18] sm:$0xff]
          %v1128 = vld [vmem:[#allocation2 + $0x20] sm:$0xff]
          %v1129 = vld [vmem:[#allocation2 + $0x28] sm:$0xff]
          %v1130 = vld [vmem:[#allocation2 + $0x30] sm:$0xff]
          %v1131 = vld [vmem:[#allocation2 + $0x38] sm:$0xff]
          %v1132 = vld [vmem:[#allocation2 + $0x40] sm:$0xff]
          %v1133 = vld [vmem:[#allocation2 + $0x48] sm:$0xff]
          %v1134 = vld [vmem:[#allocation2 + $0x50] sm:$0xff]
          %v1135 = vld [vmem:[#allocation2 + $0x58] sm:$0xff]
          %v1136 = vld [vmem:[#allocation2 + $0x60] sm:$0xff]
          %v1137 = vld [vmem:[#allocation2 + $0x68] sm:$0xff]
          %v1138 = vld [vmem:[#allocation2 + $0x70] sm:$0xff]
          %v1139 = vld [vmem:[#allocation2 + $0x78] sm:$0xff]
          %v1140 = vld [vmem:[#allocation2 + $0x80] sm:$0xff]
          %v1141 = vld [vmem:[#allocation2 + $0x88] sm:$0xff]
          %v1142 = vld [vmem:[#allocation2 + $0x90] sm:$0xff]
          %v1143 = vld [vmem:[#allocation2 + $0x98] sm:$0xff]
          %v1144 = vld [vmem:[#allocation2 + $0xa0] sm:$0xff]
          %v1145 = vld [vmem:[#allocation2 + $0xa8] sm:$0xff]
          %v1146 = vld [vmem:[#allocation2 + $0xb0] sm:$0xff]
          %v1147 = vld [vmem:[#allocation2 + $0xb8] sm:$0xff]
          %v1148 = vld [vmem:[#allocation2 + $0xc0] sm:$0xff]
          %v1149 = vld [vmem:[#allocation2 + $0xc8] sm:$0xff]
          %v1150 = vld [vmem:[#allocation2 + $0xd0] sm:$0xff]
          %v1151 = vld [vmem:[#allocation2 + $0xd8] sm:$0xff]
          %v1152 = vld [vmem:[#allocation2 + $0xe0] sm:$0xff]
          %v1153 = vld [vmem:[#allocation2 + $0xe8] sm:$0xff]
          %v1154 = vld [vmem:[#allocation2 + $0xf0] sm:$0xff]
          %v1155 = vld [vmem:[#allocation2 + $0xf8] sm:$0xff]
          %v1156 = vld [vmem:[#allocation2 + $0x100] sm:$0xff]
          %v1157 = vld [vmem:[#allocation2 + $0x108] sm:$0xff]
          %v1158 = vld [vmem:[#allocation2 + $0x110] sm:$0xff]
          %v1159 = vld [vmem:[#allocation2 + $0x118] sm:$0xff]
          %v1160 = vld [vmem:[#allocation2 + $0x120] sm:$0xff]
          %v1161 = vld [vmem:[#allocation2 + $0x128] sm:$0xff]
          %v1162 = vld [vmem:[#allocation2 + $0x130] sm:$0xff]
          %v1163 = vld [vmem:[#allocation2 + $0x138] sm:$0xff]
          %v1164 = vld [vmem:[#allocation2 + $0x140] sm:$0xff]
          %v1165 = vld [vmem:[#allocation2 + $0x148] sm:$0xff]
          %v1166 = vld [vmem:[#allocation2 + $0x150] sm:$0xff]
          %v1167 = vld [vmem:[#allocation2 + $0x158] sm:$0xff]
          %v1168 = vld [vmem:[#allocation2 + $0x160] sm:$0xff]
          %v1169 = vld [vmem:[#allocation2 + $0x168] sm:$0xff]
          %v1170 = vld [vmem:[#allocation2 + $0x170] sm:$0xff]
          %v1171 = vld [vmem:[#allocation2 + $0x178] sm:$0xff]
          %v1172 = vld [vmem:[#allocation2 + $0x180] sm:$0xff]
          %v1173 = vld [vmem:[#allocation2 + $0x188] sm:$0xff]
          %v1174 = vld [vmem:[#allocation2 + $0x190] sm:$0xff]
          %v1175 = vld [vmem:[#allocation2 + $0x198] sm:$0xff]
          %v1176 = vld [vmem:[#allocation2 + $0x1a0] sm:$0xff]
          %v1177 = vld [vmem:[#allocation2 + $0x1a8] sm:$0xff]
          %v1178 = vld [vmem:[#allocation2 + $0x1b0] sm:$0xff]
          %v1179 = vld [vmem:[#allocation2 + $0x1b8] sm:$0xff]
          %v1180 = vld [vmem:[#allocation2 + $0x1c0] sm:$0xff]
          %v1181 = vld [vmem:[#allocation2 + $0x1c8] sm:$0xff]
          %v1182 = vld [vmem:[#allocation2 + $0x1d0] sm:$0xff]
          %v1183 = vld [vmem:[#allocation2 + $0x1d8] sm:$0xff]
          %v1184 = vld [vmem:[#allocation2 + $0x1e0] sm:$0xff]
          %v1185 = vld [vmem:[#allocation2 + $0x1e8] sm:$0xff]
          %v1186 = vld [vmem:[#allocation2 + $0x1f0] sm:$0xff]
          %v1187 = vld [vmem:[#allocation2 + $0x1f8] sm:$0xff]
          %v1188 = vld [vmem:[%s249] sm:$0x1]
          %v1190 = vlaneseq
          %v1191 = vshrl.u32 %v1190, 7
          %v1192 = vsub.s32 0, %v1191
          %v1193 = vrot.slane %v1188, %v1192
          %v1195 = vadd.f32 %v1124, %v1193
          %v1196 = vadd.f32 %v1125, %v1193
          %v1197 = vadd.f32 %v1126, %v1193
          %v1198 = vadd.f32 %v1127, %v1193
          %v1199 = vadd.f32 %v1128, %v1193
          %v1200 = vadd.f32 %v1129, %v1193
          %v1201 = vadd.f32 %v1130, %v1193
          %v1202 = vadd.f32 %v1131, %v1193
          %v1203 = vadd.f32 %v1132, %v1193
          %v1204 = vadd.f32 %v1133, %v1193
          %v1205 = vadd.f32 %v1134, %v1193
          %v1206 = vadd.f32 %v1135, %v1193
          %v1207 = vadd.f32 %v1136, %v1193
          %v1208 = vadd.f32 %v1137, %v1193
          %v1209 = vadd.f32 %v1138, %v1193
          %v1210 = vadd.f32 %v1139, %v1193
          %v1211 = vadd.f32 %v1140, %v1193
          %v1212 = vadd.f32 %v1141, %v1193
          %v1213 = vadd.f32 %v1142, %v1193
          %v1214 = vadd.f32 %v1143, %v1193
          %v1215 = vadd.f32 %v1144, %v1193
          %v1216 = vadd.f32 %v1145, %v1193
          %v1217 = vadd.f32 %v1146, %v1193
          %v1218 = vadd.f32 %v1147, %v1193
          %v1219 = vadd.f32 %v1148, %v1193
          %v1220 = vadd.f32 %v1149, %v1193
          %v1221 = vadd.f32 %v1150, %v1193
          %v1222 = vadd.f32 %v1151, %v1193
          %v1223 = vadd.f32 %v1152, %v1193
          %v1224 = vadd.f32 %v1153, %v1193
          %v1225 = vadd.f32 %v1154, %v1193
          %v1226 = vadd.f32 %v1155, %v1193
          %v1227 = vadd.f32 %v1156, %v1193
          %v1228 = vadd.f32 %v1157, %v1193
          %v1229 = vadd.f32 %v1158, %v1193
          %v1230 = vadd.f32 %v1159, %v1193
          %v1231 = vadd.f32 %v1160, %v1193
          %v1232 = vadd.f32 %v1161, %v1193
          %v1233 = vadd.f32 %v1162, %v1193
          %v1234 = vadd.f32 %v1163, %v1193
          %v1235 = vadd.f32 %v1164, %v1193
          %v1236 = vadd.f32 %v1165, %v1193
          %v1237 = vadd.f32 %v1166, %v1193
          %v1238 = vadd.f32 %v1167, %v1193
          %v1239 = vadd.f32 %v1168, %v1193
          %v1240 = vadd.f32 %v1169, %v1193
          %v1241 = vadd.f32 %v1170, %v1193
          %v1242 = vadd.f32 %v1171, %v1193
          %v1243 = vadd.f32 %v1172, %v1193
          %v1244 = vadd.f32 %v1173, %v1193
          %v1245 = vadd.f32 %v1174, %v1193
          %v1246 = vadd.f32 %v1175, %v1193
          %v1247 = vadd.f32 %v1176, %v1193
          %v1248 = vadd.f32 %v1177, %v1193
          %v1249 = vadd.f32 %v1178, %v1193
          %v1250 = vadd.f32 %v1179, %v1193
          %v1251 = vadd.f32 %v1180, %v1193
          %v1252 = vadd.f32 %v1181, %v1193
          %v1253 = vadd.f32 %v1182, %v1193
          %v1254 = vadd.f32 %v1183, %v1193
          %v1255 = vadd.f32 %v1184, %v1193
          %v1256 = vadd.f32 %v1185, %v1193
          %v1257 = vadd.f32 %v1186, %v1193
          %v1258 = vadd.f32 %v1187, %v1193
          %vm1259 = vcmp.ge.f32.partialorder %v1195, 0.0
          %vm1260 = vcmp.ge.f32.partialorder %v1196, 0.0
          %vm1261 = vcmp.ge.f32.partialorder %v1197, 0.0
          %vm1262 = vcmp.ge.f32.partialorder %v1198, 0.0
          %vm1263 = vcmp.ge.f32.partialorder %v1199, 0.0
          %vm1264 = vcmp.ge.f32.partialorder %v1200, 0.0
          %vm1265 = vcmp.ge.f32.partialorder %v1201, 0.0
          %vm1266 = vcmp.ge.f32.partialorder %v1202, 0.0
          %vm1267 = vcmp.ge.f32.partialorder %v1203, 0.0
          %vm1268 = vcmp.ge.f32.partialorder %v1204, 0.0
          %vm1269 = vcmp.ge.f32.partialorder %v1205, 0.0
          %vm1270 = vcmp.ge.f32.partialorder %v1206, 0.0
          %vm1271 = vcmp.ge.f32.partialorder %v1207, 0.0
          %vm1272 = vcmp.ge.f32.partialorder %v1208, 0.0
          %vm1273 = vcmp.ge.f32.partialorder %v1209, 0.0
          %vm1274 = vcmp.ge.f32.partialorder %v1210, 0.0
          %vm1275 = vcmp.ge.f32.partialorder %v1211, 0.0
          %vm1276 = vcmp.ge.f32.partialorder %v1212, 0.0
          %vm1277 = vcmp.ge.f32.partialorder %v1213, 0.0
          %vm1278 = vcmp.ge.f32.partialorder %v1214, 0.0
          %vm1279 = vcmp.ge.f32.partialorder %v1215, 0.0
          %vm1280 = vcmp.ge.f32.partialorder %v1216, 0.0
          %vm1281 = vcmp.ge.f32.partialorder %v1217, 0.0
          %vm1282 = vcmp.ge.f32.partialorder %v1218, 0.0
          %vm1283 = vcmp.ge.f32.partialorder %v1219, 0.0
          %vm1284 = vcmp.ge.f32.partialorder %v1220, 0.0
          %vm1285 = vcmp.ge.f32.partialorder %v1221, 0.0
          %vm1286 = vcmp.ge.f32.partialorder %v1222, 0.0
          %vm1287 = vcmp.ge.f32.partialorder %v1223, 0.0
          %vm1288 = vcmp.ge.f32.partialorder %v1224, 0.0
          %vm1289 = vcmp.ge.f32.partialorder %v1225, 0.0
          %vm1290 = vcmp.ge.f32.partialorder %v1226, 0.0
          %vm1291 = vcmp.ge.f32.partialorder %v1227, 0.0
          %vm1292 = vcmp.ge.f32.partialorder %v1228, 0.0
          %vm1293 = vcmp.ge.f32.partialorder %v1229, 0.0
          %vm1294 = vcmp.ge.f32.partialorder %v1230, 0.0
          %vm1295 = vcmp.ge.f32.partialorder %v1231, 0.0
          %vm1296 = vcmp.ge.f32.partialorder %v1232, 0.0
          %vm1297 = vcmp.ge.f32.partialorder %v1233, 0.0
          %vm1298 = vcmp.ge.f32.partialorder %v1234, 0.0
          %vm1299 = vcmp.ge.f32.partialorder %v1235, 0.0
          %vm1300 = vcmp.ge.f32.partialorder %v1236, 0.0
          %vm1301 = vcmp.ge.f32.partialorder %v1237, 0.0
          %vm1302 = vcmp.ge.f32.partialorder %v1238, 0.0
          %vm1303 = vcmp.ge.f32.partialorder %v1239, 0.0
          %vm1304 = vcmp.ge.f32.partialorder %v1240, 0.0
          %vm1305 = vcmp.ge.f32.partialorder %v1241, 0.0
          %vm1306 = vcmp.ge.f32.partialorder %v1242, 0.0
          %vm1307 = vcmp.ge.f32.partialorder %v1243, 0.0
          %vm1308 = vcmp.ge.f32.partialorder %v1244, 0.0
          %vm1309 = vcmp.ge.f32.partialorder %v1245, 0.0
          %vm1310 = vcmp.ge.f32.partialorder %v1246, 0.0
          %vm1311 = vcmp.ge.f32.partialorder %v1247, 0.0
          %vm1312 = vcmp.ge.f32.partialorder %v1248, 0.0
          %vm1313 = vcmp.ge.f32.partialorder %v1249, 0.0
          %vm1314 = vcmp.ge.f32.partialorder %v1250, 0.0
          %vm1315 = vcmp.ge.f32.partialorder %v1251, 0.0
          %vm1316 = vcmp.ge.f32.partialorder %v1252, 0.0
          %vm1317 = vcmp.ge.f32.partialorder %v1253, 0.0
          %vm1318 = vcmp.ge.f32.partialorder %v1254, 0.0
          %vm1319 = vcmp.ge.f32.partialorder %v1255, 0.0
          %vm1320 = vcmp.ge.f32.partialorder %v1256, 0.0
          %vm1321 = vcmp.ge.f32.partialorder %v1257, 0.0
          %vm1322 = vcmp.ge.f32.partialorder %v1258, 0.0
          %v1323 = vmul.f32 %v1195, 0.1
          %v1324 = vmul.f32 %v1196, 0.1
          %v1325 = vmul.f32 %v1197, 0.1
          %v1326 = vmul.f32 %v1198, 0.1
          %v1327 = vmul.f32 %v1199, 0.1
          %v1328 = vmul.f32 %v1200, 0.1
          %v1329 = vmul.f32 %v1201, 0.1
          %v1330 = vmul.f32 %v1202, 0.1
          %v1331 = vmul.f32 %v1203, 0.1
          %v1332 = vmul.f32 %v1204, 0.1
          %v1333 = vmul.f32 %v1205, 0.1
          %v1334 = vmul.f32 %v1206, 0.1
          %v1335 = vmul.f32 %v1207, 0.1
          %v1336 = vmul.f32 %v1208, 0.1
          %v1337 = vmul.f32 %v1209, 0.1
          %v1338 = vmul.f32 %v1210, 0.1
          %v1339 = vmul.f32 %v1211, 0.1
          %v1340 = vmul.f32 %v1212, 0.1
          %v1341 = vmul.f32 %v1213, 0.1
          %v1342 = vmul.f32 %v1214, 0.1
          %v1343 = vmul.f32 %v1215, 0.1
          %v1344 = vmul.f32 %v1216, 0.1
          %v1345 = vmul.f32 %v1217, 0.1
          %v1346 = vmul.f32 %v1218, 0.1
          %v1347 = vmul.f32 %v1219, 0.1
          %v1348 = vmul.f32 %v1220, 0.1
          %v1349 = vmul.f32 %v1221, 0.1
          %v1350 = vmul.f32 %v1222, 0.1
          %v1351 = vmul.f32 %v1223, 0.1
          %v1352 = vmul.f32 %v1224, 0.1
          %v1353 = vmul.f32 %v1225, 0.1
          %v1354 = vmul.f32 %v1226, 0.1
          %v1355 = vmul.f32 %v1227, 0.1
          %v1356 = vmul.f32 %v1228, 0.1
          %v1357 = vmul.f32 %v1229, 0.1
          %v1358 = vmul.f32 %v1230, 0.1
          %v1359 = vmul.f32 %v1231, 0.1
          %v1360 = vmul.f32 %v1232, 0.1
          %v1361 = vmul.f32 %v1233, 0.1
          %v1362 = vmul.f32 %v1234, 0.1
          %v1363 = vmul.f32 %v1235, 0.1
          %v1364 = vmul.f32 %v1236, 0.1
          %v1365 = vmul.f32 %v1237, 0.1
          %v1366 = vmul.f32 %v1238, 0.1
          %v1367 = vmul.f32 %v1239, 0.1
          %v1368 = vmul.f32 %v1240, 0.1
          %v1369 = vmul.f32 %v1241, 0.1
          %v1370 = vmul.f32 %v1242, 0.1
          %v1371 = vmul.f32 %v1243, 0.1
          %v1372 = vmul.f32 %v1244, 0.1
          %v1373 = vmul.f32 %v1245, 0.1
          %v1374 = vmul.f32 %v1246, 0.1
          %v1375 = vmul.f32 %v1247, 0.1
          %v1376 = vmul.f32 %v1248, 0.1
          %v1377 = vmul.f32 %v1249, 0.1
          %v1378 = vmul.f32 %v1250, 0.1
          %v1379 = vmul.f32 %v1251, 0.1
          %v1380 = vmul.f32 %v1252, 0.1
          %v1381 = vmul.f32 %v1253, 0.1
          %v1382 = vmul.f32 %v1254, 0.1
          %v1383 = vmul.f32 %v1255, 0.1
          %v1384 = vmul.f32 %v1256, 0.1
          %v1385 = vmul.f32 %v1257, 0.1
          %v1386 = vmul.f32 %v1258, 0.1
          %v1387 = vsel %vm1259, %v1195, %v1323
          %v1388 = vsel %vm1260, %v1196, %v1324
          %v1389 = vsel %vm1261, %v1197, %v1325
          %v1390 = vsel %vm1262, %v1198, %v1326
          %v1391 = vsel %vm1263, %v1199, %v1327
          %v1392 = vsel %vm1264, %v1200, %v1328
          %v1393 = vsel %vm1265, %v1201, %v1329
          %v1394 = vsel %vm1266, %v1202, %v1330
          %v1395 = vsel %vm1267, %v1203, %v1331
          %v1396 = vsel %vm1268, %v1204, %v1332
          %v1397 = vsel %vm1269, %v1205, %v1333
          %v1398 = vsel %vm1270, %v1206, %v1334
          %v1399 = vsel %vm1271, %v1207, %v1335
          %v1400 = vsel %vm1272, %v1208, %v1336
          %v1401 = vsel %vm1273, %v1209, %v1337
          %v1402 = vsel %vm1274, %v1210, %v1338
          %v1403 = vsel %vm1275, %v1211, %v1339
          %v1404 = vsel %vm1276, %v1212, %v1340
          %v1405 = vsel %vm1277, %v1213, %v1341
          %v1406 = vsel %vm1278, %v1214, %v1342
          %v1407 = vsel %vm1279, %v1215, %v1343
          %v1408 = vsel %vm1280, %v1216, %v1344
          %v1409 = vsel %vm1281, %v1217, %v1345
          %v1410 = vsel %vm1282, %v1218, %v1346
          %v1411 = vsel %vm1283, %v1219, %v1347
          %v1412 = vsel %vm1284, %v1220, %v1348
          %v1413 = vsel %vm1285, %v1221, %v1349
          %v1414 = vsel %vm1286, %v1222, %v1350
          %v1415 = vsel %vm1287, %v1223, %v1351
          %v1416 = vsel %vm1288, %v1224, %v1352
          %v1417 = vsel %vm1289, %v1225, %v1353
          %v1418 = vsel %vm1290, %v1226, %v1354
          %v1419 = vsel %vm1291, %v1227, %v1355
          %v1420 = vsel %vm1292, %v1228, %v1356
          %v1421 = vsel %vm1293, %v1229, %v1357
          %v1422 = vsel %vm1294, %v1230, %v1358
          %v1423 = vsel %vm1295, %v1231, %v1359
          %v1424 = vsel %vm1296, %v1232, %v1360
          %v1425 = vsel %vm1297, %v1233, %v1361
          %v1426 = vsel %vm1298, %v1234, %v1362
          %v1427 = vsel %vm1299, %v1235, %v1363
          %v1428 = vsel %vm1300, %v1236, %v1364
          %v1429 = vsel %vm1301, %v1237, %v1365
          %v1430 = vsel %vm1302, %v1238, %v1366
          %v1431 = vsel %vm1303, %v1239, %v1367
          %v1432 = vsel %vm1304, %v1240, %v1368
          %v1433 = vsel %vm1305, %v1241, %v1369
          %v1434 = vsel %vm1306, %v1242, %v1370
          %v1435 = vsel %vm1307, %v1243, %v1371
          %v1436 = vsel %vm1308, %v1244, %v1372
          %v1437 = vsel %vm1309, %v1245, %v1373
          %v1438 = vsel %vm1310, %v1246, %v1374
          %v1439 = vsel %vm1311, %v1247, %v1375
          %v1440 = vsel %vm1312, %v1248, %v1376
          %v1441 = vsel %vm1313, %v1249, %v1377
          %v1442 = vsel %vm1314, %v1250, %v1378
          %v1443 = vsel %vm1315, %v1251, %v1379
          %v1444 = vsel %vm1316, %v1252, %v1380
          %v1445 = vsel %vm1317, %v1253, %v1381
          %v1446 = vsel %vm1318, %v1254, %v1382
          %v1447 = vsel %vm1319, %v1255, %v1383
          %v1448 = vsel %vm1320, %v1256, %v1384
          %v1449 = vsel %vm1321, %v1257, %v1385
          %v1450 = vsel %vm1322, %v1258, %v1386
          %v1451 = vpack.c.bf16 %v1388, %v1387
          %v1452 = vpack.c.bf16 %v1390, %v1389
          %v1453 = vpack.c.bf16 %v1392, %v1391
          %v1454 = vpack.c.bf16 %v1394, %v1393
          %v1455 = vpack.c.bf16 %v1396, %v1395
          %v1456 = vpack.c.bf16 %v1398, %v1397
          %v1457 = vpack.c.bf16 %v1400, %v1399
          %v1458 = vpack.c.bf16 %v1402, %v1401
          %v1459 = vpack.c.bf16 %v1404, %v1403
          %v1460 = vpack.c.bf16 %v1406, %v1405
          %v1461 = vpack.c.bf16 %v1408, %v1407
          %v1462 = vpack.c.bf16 %v1410, %v1409
          %v1463 = vpack.c.bf16 %v1412, %v1411
          %v1464 = vpack.c.bf16 %v1414, %v1413
          %v1465 = vpack.c.bf16 %v1416, %v1415
          %v1466 = vpack.c.bf16 %v1418, %v1417
          %v1467 = vpack.c.bf16 %v1420, %v1419
          %v1468 = vpack.c.bf16 %v1422, %v1421
          %v1469 = vpack.c.bf16 %v1424, %v1423
          %v1470 = vpack.c.bf16 %v1426, %v1425
          %v1471 = vpack.c.bf16 %v1428, %v1427
          %v1472 = vpack.c.bf16 %v1430, %v1429
          %v1473 = vpack.c.bf16 %v1432, %v1431
          %v1474 = vpack.c.bf16 %v1434, %v1433
          %v1475 = vpack.c.bf16 %v1436, %v1435
          %v1476 = vpack.c.bf16 %v1438, %v1437
          %v1477 = vpack.c.bf16 %v1440, %v1439
          %v1478 = vpack.c.bf16 %v1442, %v1441
          %v1479 = vpack.c.bf16 %v1444, %v1443
          %v1480 = vpack.c.bf16 %v1446, %v1445
          %v1481 = vpack.c.bf16 %v1448, %v1447
          %v1482 = vpack.c.bf16 %v1450, %v1449
          %v1515 = vunpack.c.l.b16 %v1451
          %v1516 = vunpack.c.h.b16 %v1451
          %v1517 = vunpack.c.l.b16 %v1452
          %v1518 = vunpack.c.h.b16 %v1452
          %v1519 = vunpack.c.l.b16 %v1453
          %v1520 = vunpack.c.h.b16 %v1453
          %v1521 = vunpack.c.l.b16 %v1454
          %v1522 = vunpack.c.h.b16 %v1454
          %v1523 = vunpack.c.l.b16 %v1455
          %v1524 = vunpack.c.h.b16 %v1455
          %v1525 = vunpack.c.l.b16 %v1456
          %v1526 = vunpack.c.h.b16 %v1456
          %v1527 = vunpack.c.l.b16 %v1457
          %v1528 = vunpack.c.h.b16 %v1457
          %v1529 = vunpack.c.l.b16 %v1458
          %v1530 = vunpack.c.h.b16 %v1458
          %v1531 = vunpack.c.l.b16 %v1459
          %v1532 = vunpack.c.h.b16 %v1459
          %v1533 = vunpack.c.l.b16 %v1460
          %v1534 = vunpack.c.h.b16 %v1460
          %v1535 = vunpack.c.l.b16 %v1461
          %v1536 = vunpack.c.h.b16 %v1461
          %v1537 = vunpack.c.l.b16 %v1462
          %v1538 = vunpack.c.h.b16 %v1462
          %v1539 = vunpack.c.l.b16 %v1463
          %v1540 = vunpack.c.h.b16 %v1463
          %v1541 = vunpack.c.l.b16 %v1464
          %v1542 = vunpack.c.h.b16 %v1464
          %v1543 = vunpack.c.l.b16 %v1465
          %v1544 = vunpack.c.h.b16 %v1465
          %v1545 = vunpack.c.l.b16 %v1466
          %v1546 = vunpack.c.h.b16 %v1466
          %v1547 = vunpack.c.l.b16 %v1467
          %v1548 = vunpack.c.h.b16 %v1467
          %v1549 = vunpack.c.l.b16 %v1468
          %v1550 = vunpack.c.h.b16 %v1468
          %v1551 = vunpack.c.l.b16 %v1469
          %v1552 = vunpack.c.h.b16 %v1469
          %v1553 = vunpack.c.l.b16 %v1470
          %v1554 = vunpack.c.h.b16 %v1470
          %v1555 = vunpack.c.l.b16 %v1471
          %v1556 = vunpack.c.h.b16 %v1471
          %v1557 = vunpack.c.l.b16 %v1472
          %v1558 = vunpack.c.h.b16 %v1472
          %v1559 = vunpack.c.l.b16 %v1473
          %v1560 = vunpack.c.h.b16 %v1473
          %v1561 = vunpack.c.l.b16 %v1474
          %v1562 = vunpack.c.h.b16 %v1474
          %v1563 = vunpack.c.l.b16 %v1475
          %v1564 = vunpack.c.h.b16 %v1475
          %v1565 = vunpack.c.l.b16 %v1476
          %v1566 = vunpack.c.h.b16 %v1476
          %v1567 = vunpack.c.l.b16 %v1477
          %v1568 = vunpack.c.h.b16 %v1477
          %v1569 = vunpack.c.l.b16 %v1478
          %v1570 = vunpack.c.h.b16 %v1478
          %v1571 = vunpack.c.l.b16 %v1479
          %v1572 = vunpack.c.h.b16 %v1479
          %v1573 = vunpack.c.l.b16 %v1480
          %v1574 = vunpack.c.h.b16 %v1480
          %v1575 = vunpack.c.l.b16 %v1481
          %v1576 = vunpack.c.h.b16 %v1481
          %v1577 = vunpack.c.l.b16 %v1482
          %v1578 = vunpack.c.h.b16 %v1482
          %v1579 = vpack.c.b16 %v1515, %v1515
          %v1580 = vpack.c.b16 %v1516, %v1516
          %v1581 = vpack.c.b16 %v1517, %v1517
          %v1582 = vpack.c.b16 %v1518, %v1518
          %v1583 = vpack.c.b16 %v1519, %v1519
          %v1584 = vpack.c.b16 %v1520, %v1520
          %v1585 = vpack.c.b16 %v1521, %v1521
          %v1586 = vpack.c.b16 %v1522, %v1522
          %v1587 = vpack.c.b16 %v1523, %v1523
          %v1588 = vpack.c.b16 %v1524, %v1524
          %v1589 = vpack.c.b16 %v1525, %v1525
          %v1590 = vpack.c.b16 %v1526, %v1526
          %v1591 = vpack.c.b16 %v1527, %v1527
          %v1592 = vpack.c.b16 %v1528, %v1528
          %v1593 = vpack.c.b16 %v1529, %v1529
          %v1594 = vpack.c.b16 %v1530, %v1530
          %v1595 = vpack.c.b16 %v1531, %v1531
          %v1596 = vpack.c.b16 %v1532, %v1532
          %v1597 = vpack.c.b16 %v1533, %v1533
          %v1598 = vpack.c.b16 %v1534, %v1534
          %v1599 = vpack.c.b16 %v1535, %v1535
          %v1600 = vpack.c.b16 %v1536, %v1536
          %v1601 = vpack.c.b16 %v1537, %v1537
          %v1602 = vpack.c.b16 %v1538, %v1538
          %v1603 = vpack.c.b16 %v1539, %v1539
          %v1604 = vpack.c.b16 %v1540, %v1540
          %v1605 = vpack.c.b16 %v1541, %v1541
          %v1606 = vpack.c.b16 %v1542, %v1542
          %v1607 = vpack.c.b16 %v1543, %v1543
          %v1608 = vpack.c.b16 %v1544, %v1544
          %v1609 = vpack.c.b16 %v1545, %v1545
          %v1610 = vpack.c.b16 %v1546, %v1546
          %v1611 = vpack.c.b16 %v1547, %v1547
          %v1612 = vpack.c.b16 %v1548, %v1548
          %v1613 = vpack.c.b16 %v1549, %v1549
          %v1614 = vpack.c.b16 %v1550, %v1550
          %v1615 = vpack.c.b16 %v1551, %v1551
          %v1616 = vpack.c.b16 %v1552, %v1552
          %v1617 = vpack.c.b16 %v1553, %v1553
          %v1618 = vpack.c.b16 %v1554, %v1554
          %v1619 = vpack.c.b16 %v1555, %v1555
          %v1620 = vpack.c.b16 %v1556, %v1556
          %v1621 = vpack.c.b16 %v1557, %v1557
          %v1622 = vpack.c.b16 %v1558, %v1558
          %v1623 = vpack.c.b16 %v1559, %v1559
          %v1624 = vpack.c.b16 %v1560, %v1560
          %v1625 = vpack.c.b16 %v1561, %v1561
          %v1626 = vpack.c.b16 %v1562, %v1562
          %v1627 = vpack.c.b16 %v1563, %v1563
          %v1628 = vpack.c.b16 %v1564, %v1564
          %v1629 = vpack.c.b16 %v1565, %v1565
          %v1630 = vpack.c.b16 %v1566, %v1566
          %v1631 = vpack.c.b16 %v1567, %v1567
          %v1632 = vpack.c.b16 %v1568, %v1568
          %v1633 = vpack.c.b16 %v1569, %v1569
          %v1634 = vpack.c.b16 %v1570, %v1570
          %v1635 = vpack.c.b16 %v1571, %v1571
          %v1636 = vpack.c.b16 %v1572, %v1572
          %v1637 = vpack.c.b16 %v1573, %v1573
          %v1638 = vpack.c.b16 %v1574, %v1574
          %v1639 = vpack.c.b16 %v1575, %v1575
          %v1640 = vpack.c.b16 %v1576, %v1576
          %v1641 = vpack.c.b16 %v1577, %v1577
          %v1642 = vpack.c.b16 %v1578, %v1578
          %1707 = vst [vmem:[%s228] sm:$0xf] %v1579
          %1708 = vst [vmem:[%s228 + $0x4] sm:$0xf] %v1580
          %1709 = vst [vmem:[%s228 + $0x8] sm:$0xf] %v1581
          %1710 = vst [vmem:[%s228 + $0xc] sm:$0xf] %v1582
          %1711 = vst [vmem:[%s228 + $0x10] sm:$0xf] %v1583
          %1712 = vst [vmem:[%s228 + $0x14] sm:$0xf] %v1584
          %1713 = vst [vmem:[%s228 + $0x18] sm:$0xf] %v1585
          %1714 = vst [vmem:[%s228 + $0x1c] sm:$0xf] %v1586
          %1715 = vst [vmem:[%s228 + $0x20] sm:$0xf] %v1587
          %1716 = vst [vmem:[%s228 + $0x24] sm:$0xf] %v1588
          %1717 = vst [vmem:[%s228 + $0x28] sm:$0xf] %v1589
          %1718 = vst [vmem:[%s228 + $0x2c] sm:$0xf] %v1590
          %1719 = vst [vmem:[%s228 + $0x30] sm:$0xf] %v1591
          %1720 = vst [vmem:[%s228 + $0x34] sm:$0xf] %v1592
          %1721 = vst [vmem:[%s228 + $0x38] sm:$0xf] %v1593
          %1722 = vst [vmem:[%s228 + $0x3c] sm:$0xf] %v1594
          %1723 = vst [vmem:[%s228 + $0x40] sm:$0xf] %v1595
          %1724 = vst [vmem:[%s228 + $0x44] sm:$0xf] %v1596
          %1725 = vst [vmem:[%s228 + $0x48] sm:$0xf] %v1597
          %1726 = vst [vmem:[%s228 + $0x4c] sm:$0xf] %v1598
          %1727 = vst [vmem:[%s228 + $0x50] sm:$0xf] %v1599
          %1728 = vst [vmem:[%s228 + $0x54] sm:$0xf] %v1600
          %1729 = vst [vmem:[%s228 + $0x58] sm:$0xf] %v1601
          %1730 = vst [vmem:[%s228 + $0x5c] sm:$0xf] %v1602
          %1731 = vst [vmem:[%s228 + $0x60] sm:$0xf] %v1603
          %1732 = vst [vmem:[%s228 + $0x64] sm:$0xf] %v1604
          %1733 = vst [vmem:[%s228 + $0x68] sm:$0xf] %v1605
          %1734 = vst [vmem:[%s228 + $0x6c] sm:$0xf] %v1606
          %1735 = vst [vmem:[%s228 + $0x70] sm:$0xf] %v1607
          %1736 = vst [vmem:[%s228 + $0x74] sm:$0xf] %v1608
          %1737 = vst [vmem:[%s228 + $0x78] sm:$0xf] %v1609
          %1738 = vst [vmem:[%s228 + $0x7c] sm:$0xf] %v1610
          %1739 = vst [vmem:[%s228 + $0x80] sm:$0xf] %v1611
          %1740 = vst [vmem:[%s228 + $0x84] sm:$0xf] %v1612
          %1741 = vst [vmem:[%s228 + $0x88] sm:$0xf] %v1613
          %1742 = vst [vmem:[%s228 + $0x8c] sm:$0xf] %v1614
          %1743 = vst [vmem:[%s228 + $0x90] sm:$0xf] %v1615
          %1744 = vst [vmem:[%s228 + $0x94] sm:$0xf] %v1616
          %1745 = vst [vmem:[%s228 + $0x98] sm:$0xf] %v1617
          %1746 = vst [vmem:[%s228 + $0x9c] sm:$0xf] %v1618
          %1747 = vst [vmem:[%s228 + $0xa0] sm:$0xf] %v1619
          %1748 = vst [vmem:[%s228 + $0xa4] sm:$0xf] %v1620
          %1749 = vst [vmem:[%s228 + $0xa8] sm:$0xf] %v1621
          %1750 = vst [vmem:[%s228 + $0xac] sm:$0xf] %v1622
          %1751 = vst [vmem:[%s228 + $0xb0] sm:$0xf] %v1623
          %1752 = vst [vmem:[%s228 + $0xb4] sm:$0xf] %v1624
          %1753 = vst [vmem:[%s228 + $0xb8] sm:$0xf] %v1625
          %1754 = vst [vmem:[%s228 + $0xbc] sm:$0xf] %v1626
          %1755 = vst [vmem:[%s228 + $0xc0] sm:$0xf] %v1627
          %1756 = vst [vmem:[%s228 + $0xc4] sm:$0xf] %v1628
          %1757 = vst [vmem:[%s228 + $0xc8] sm:$0xf] %v1629
          %1758 = vst [vmem:[%s228 + $0xcc] sm:$0xf] %v1630
          %1759 = vst [vmem:[%s228 + $0xd0] sm:$0xf] %v1631
          %1760 = vst [vmem:[%s228 + $0xd4] sm:$0xf] %v1632
          %1761 = vst [vmem:[%s228 + $0xd8] sm:$0xf] %v1633
          %1762 = vst [vmem:[%s228 + $0xdc] sm:$0xf] %v1634
          %1763 = vst [vmem:[%s228 + $0xe0] sm:$0xf] %v1635
          %1764 = vst [vmem:[%s228 + $0xe4] sm:$0xf] %v1636
          %1765 = vst [vmem:[%s228 + $0xe8] sm:$0xf] %v1637
          %1766 = vst [vmem:[%s228 + $0xec] sm:$0xf] %v1638
          %1767 = vst [vmem:[%s228 + $0xf0] sm:$0xf] %v1639
          %1768 = vst [vmem:[%s228 + $0xf4] sm:$0xf] %v1640
          %1769 = vst [vmem:[%s228 + $0xf8] sm:$0xf] %v1641
          %1770 = vst [vmem:[%s228 + $0xfc] sm:$0xf] %v1642
        $region40: #{conv2d_fused.1} parent=31 // pred_fallthru
          _
        %s1771 = sand.u32 %s128, 1
        %s1772 = scalar_lea.sflag [#allocation4], %s1771
        %s1773 = sand.u32 %s128, 1
        %s1774 = smul.addr %s1773, 256
        %s1775 = scalar_lea.vmem [#allocation3], %s1774
        // Predicated region
        $region41: #{conv2d_fused.1} parent=31 // pred_check
          %p1776 = pneg %p138
        $region42: #{conv2d_fused.1} parent=31 // pred_check_branch
          %1778 = sbr.rel (%p1776) target = $region44
        $region43: #{conv2d_fused.1} parent=31 // pred_region
          %s1779 = smul.u32 64, %s22
          %s1781 = ssub.s32 4096, 4096
          %1782 = vsyncadd %s1772, %s1781
          %s1783 = sadd.s32 %s23, %s1779
          %s1784 = smul.addr %s1783, 64
          %s1785 = scalar_lea.hbm %s3, %s1784
          %s1786 = sshll.u32 %s1775, 4
          %s1787 = int_to_ptr.vmem [resolvable:$true] %s1786
          %1792 = dma.vmem_to_hbm [thread:$0]  %s1787, 4096, %s1785, %s1772, 64, 64, 4
        $region44: #{conv2d_fused.1} parent=31 // pred_fallthru
          _
      $region32: #{conv2d_fused.1} parent=5 // pred_fallthru
        _
      %p1793 = scmp.le.s32.totalorder 2, %s12
      // Predicated region
      $region45: #{conv2d_fused.1} parent=5 // pred_check
        %p1794 = pneg %p1793
      $region46: #{conv2d_fused.1} parent=5 // pred_check_branch
        %1796 = sbr.rel (%p1794) target = $region48
      $region47: #{conv2d_fused.1} parent=5 // pred_region
        %s1797 = ssub.s32 %s12, 2
        // Predicated region
        $region49: #{conv2d_fused.1} parent=47 // pred_check
          %p1798 = pneg %p144
        $region50: #{conv2d_fused.1} parent=47 // pred_check_branch
          %1800 = sbr.rel (%p1798) target = $region52
        $region51: #{conv2d_fused.1} parent=47 // pred_region
          %s1801 = sand.u32 %s129, 1
          %s1802 = scalar_lea.sflag [#allocation4], %s1801
          %s1803 = sand.u32 %s129, 1
          %s1804 = smul.addr %s1803, 256
          %s1805 = scalar_lea.vmem [#allocation3], %s1804
          %1806 = dma.done %s1802, 4096
        $region52: #{conv2d_fused.1} parent=47 // pred_fallthru
          _
      $region48: #{conv2d_fused.1} parent=5 // pred_fallthru
        _
    $region6: #{conv2d_fused.1} parent=1 // loop_footer
      %s16 = sadd.s32 1, %s12
    $region7: #{conv2d_fused.1} parent=1 // loop_footer_branch
      %11 = sbr.rel target = $region3
    $region8: #{conv2d_fused.1} parent=1 // loop_exit
      _
    %1807 = vsyncpa [#allocation4], 1
    %s1808 = scalar_lea.sflag [#allocation4], 1
    %1809 = vsyncpa %s1808, 1

</llo_original>
